<compile_context>
chip_gen: v6e
topology: v6e:2x2x1
jax: 0.10.0
libtpu: 0.0.40
codegen_flags: <defaults>
</compile_context>

<pallas_src>
import functools

import jax
import jax.numpy as jnp
from jax.experimental import pallas as pl
from jax.experimental.pallas import tpu as pltpu


# --------------------------------------------------------------------------- #
# LSTM recurrence: one kernel invocation, static in-kernel loop over time.
# --------------------------------------------------------------------------- #
def lstm_kernel(emb_ref, h0_ref, c0_ref, wh_ref, wx_ref, b_ref,
                out_ref, hN_ref, cN_ref, *, compute_dtype):
    S = emb_ref.shape[0]
    H = h0_ref.shape[1]

    # Load weights once (no per-step re-read); elementwise gate math stays f32.
    wh = wh_ref[...].astype(compute_dtype)        # (H, 4H)
    wx = wx_ref[...].astype(compute_dtype)        # (E, 4H)
    b = b_ref[...]                                # (1, 4H) f32

    h = h0_ref[...]                               # (B, H)
    c = c0_ref[...]                               # (B, H)

    for t in range(S):                            # static unrolled recurrence
        x = emb_ref[t]                            # (B, E)
        gates = (jnp.dot(h.astype(compute_dtype), wh,
                         preferred_element_type=jnp.float32)
                 + jnp.dot(x.astype(compute_dtype), wx,
                           preferred_element_type=jnp.float32)
                 + b)                             # (B, 4H) fused f|i|o|C gates
        f = jax.nn.sigmoid(gates[:, 0 * H:1 * H])
        i = jax.nn.sigmoid(gates[:, 1 * H:2 * H])
        o = jax.nn.sigmoid(gates[:, 2 * H:3 * H])
        c_hat = jnp.tanh(gates[:, 3 * H:4 * H])
        c = c * f + c_hat * i
        h = jnp.tanh(c) * o
        out_ref[:, t, :] = h                      # batch-major per-step hidden

    hN_ref[...] = h                               # written once, after the loop
    cN_ref[...] = c


def run_lstm(embeds_sbe, h0, c0, wh, wx, b, *, compute_dtype=jnp.float32):
    """embeds_sbe: (S, B, E) f32 -> (out (B, S, H), hN (B, H), cN (B, H))."""
    S, B, E = embeds_sbe.shape
    H = h0.shape[1]
    vmem = pl.BlockSpec(memory_space=pltpu.MemorySpace.VMEM)
    return pl.pallas_call(
        functools.partial(lstm_kernel, compute_dtype=compute_dtype),
        out_shape=(jax.ShapeDtypeStruct((B, S, H), jnp.float32),
                   jax.ShapeDtypeStruct((B, H), jnp.float32),
                   jax.ShapeDtypeStruct((B, H), jnp.float32)),
        in_specs=[vmem] * 6,
        out_specs=(vmem, vmem, vmem),
    )(embeds_sbe, h0, c0, wh, wx, b)


# --------------------------------------------------------------------------- #
# Output projection: (N, H) @ (H, V) + b, tiled over rows and vocab columns.
# --------------------------------------------------------------------------- #
def linear_kernel(x_ref, w_ref, b_ref, o_ref, *, compute_dtype):
    acc = jnp.dot(x_ref[...].astype(compute_dtype),
                  w_ref[...].astype(compute_dtype),
                  preferred_element_type=jnp.float32)
    o_ref[...] = (acc + b_ref[...]).astype(o_ref.dtype)


def run_linear(x, w, b, *, block_rows=256, block_cols=512,
               compute_dtype=jnp.float32):
    """x: (N, H), w: (H, V), b: (1, V) -> (N, V)."""
    N, H = x.shape
    V = w.shape[1]
    # Pick tile sizes that respect the (8,128) rule; small shapes use full dims.
    tn = block_rows if (N > block_rows and N % 8 == 0) else N
    tv = block_cols if (V > block_cols and V % 128 == 0) else V
    grid = (pl.cdiv(N, tn), pl.cdiv(V, tv))
    return pl.pallas_call(
        functools.partial(linear_kernel, compute_dtype=compute_dtype),
        out_shape=jax.ShapeDtypeStruct((N, V), jnp.float32),
        grid=grid,
        in_specs=[pl.BlockSpec((tn, H), lambda i, j: (i, 0)),
                  pl.BlockSpec((H, tv), lambda i, j: (0, j)),
                  pl.BlockSpec((1, tv), lambda i, j: (0, j))],
        out_specs=pl.BlockSpec((tn, tv), lambda i, j: (i, j)),
        compiler_params=pltpu.CompilerParams(
            dimension_semantics=("parallel", "parallel")),
    )(x, w, b)


# --------------------------------------------------------------------------- #
# PoetryModel forward (matches the PyTorch module semantics).
# --------------------------------------------------------------------------- #
def poetry_model_forward(params, input_ids, hidden=None, cell=None):
    """input_ids: (batch, seq) int32."""
    x = input_ids.T                       # (seq, batch) -- input.transpose(1, 0)
    S, B = x.shape
    H = params["lstm_wh"].shape[0]

    if hidden is None:
        hidden = jnp.zeros((B, H), jnp.float32)
        cell = jnp.zeros((B, H), jnp.float32)

    # TODO(synk): embedding gather kept in plain JAX; could be fused into the
    # LSTM kernel via PrefetchScalarGridSpec + pl.Element row-gather.
    embeds = params["embedding"][x]       # (S, B, E)

    out_bsh, hN, cN = run_lstm(embeds, hidden, cell,
                               params["lstm_wh"], params["lstm_wx"],
                               params["lstm_b"])

    # (B, S, H) -> (B*S, H) is a free, contiguous reshape: rows are already
    # batch-major / time-minor, exactly PyTorch's transpose(1,0).view(S*B, -1).
    flat = out_bsh.reshape(S * B, H)
    logits = run_linear(flat, params["linear_w"], params["linear_b"])
    return {"output": logits, "hidden": hN, "cell": cN}


def init_params(key, vocab, embed, hidden):
    """Deterministic synthetic params with nn.Linear / nn.Embedding shapes,
    pre-packed for the fused-gate kernel and pre-transposed linear."""
    keys = jax.random.split(key, 11)
    scale = 0.1

    def gate(kw, kb):
        # nn.Linear(in=hidden+embed, out=hidden): weight (H, H+E), bias (H,)
        w = scale * jax.random.normal(kw, (hidden, hidden + embed), jnp.float32)
        bb = scale * jax.random.normal(kb, (hidden,), jnp.float32)
        # z = cat(hidden, input); z @ W.T == h @ Wh + x @ Wx  (pre-split, transposed)
        return w[:, :hidden].T, w[:, hidden:].T, bb   # (H,H), (E,H), (H,)

    gates = [gate(keys[1 + 2 * g], keys[2 + 2 * g]) for g in range(4)]  # f,i,o,C
    wh_fused = jnp.concatenate([g[0] for g in gates], axis=1)           # (H, 4H)
    wx_fused = jnp.concatenate([g[1] for g in gates], axis=1)           # (E, 4H)
    b_fused = jnp.concatenate([g[2] for g in gates], axis=0)[None, :]   # (1, 4H)

    lin_w = scale * jax.random.normal(keys[9], (vocab, hidden), jnp.float32)
    lin_b = scale * jax.random.normal(keys[10], (vocab,), jnp.float32)

    return {
        "embedding": scale * jax.random.normal(keys[0], (vocab, embed),
                                               jnp.float32),
        "lstm_wh": wh_fused,
        "lstm_wx": wx_fused,
        "lstm_b": b_fused,
        "linear_w": lin_w.T,             # pre-transposed once: (H, V)
        "linear_b": lin_b[None, :],      # pre-reshaped once: (1, V)
    }


# Pure-JAX reference of the same forward pass (per-gate math, explicit transpose
# path like PyTorch) for a correctness check of the kernels + layout trick.
def reference_forward(params, input_ids):
    x = input_ids.T
    S, B = x.shape
    H = params["lstm_wh"].shape[0]
    wh, wx, b = params["lstm_wh"], params["lstm_wx"], params["lstm_b"]
    h = jnp.zeros((B, H), jnp.float32)
    c = jnp.zeros((B, H), jnp.float32)
    embeds = params["embedding"][x]
    outs = []
    for t in range(S):
        xt = embeds[t]
        gates = h @ wh + xt @ wx + b
        f = jax.nn.sigmoid(gates[:, 0 * H:1 * H])
        i = jax.nn.sigmoid(gates[:, 1 * H:2 * H])
        o = jax.nn.sigmoid(gates[:, 2 * H:3 * H])
        ch = jnp.tanh(gates[:, 3 * H:4 * H])
        c = c * f + ch * i
        h = jnp.tanh(c) * o
        outs.append(h)
    out = jnp.stack(outs, 0)                                   # (S, B, H)
    flat = jnp.transpose(out, (1, 0, 2)).reshape(S * B, H)
    logits = flat @ params["linear_w"] + params["linear_b"]
    return {"output": logits, "hidden": h, "cell": c}


if __name__ == "__main__":
    VOCAB, EMBED, HIDDEN = 32, 16, 32
    BATCH, SEQ = 2, 8

    key = jax.random.PRNGKey(0)
    pkey, ikey = jax.random.split(key)
    params = init_params(pkey, VOCAB, EMBED, HIDDEN)
    input_ids = jax.random.randint(ikey, (BATCH, SEQ), 0, VOCAB, dtype=jnp.int32)

    result = poetry_model_forward(params, input_ids)
    jax.block_until_ready(result)

    ref = reference_forward(params, input_ids)
    for k in ("output", "hidden", "cell"):
        assert jnp.allclose(result[k], ref[k], atol=1e-5, rtol=1e-5), k

    print("KERNEL_OK")
</pallas_src>

<mosaic_0001>
module attributes {stable_mosaic.version = 11 : i64} {
  func.func @lstm_kernel(%arg0: memref<8x2x16xf32, #tpu.memory_space<vmem>>, %arg1: memref<2x32xf32, #tpu.memory_space<vmem>>, %arg2: memref<2x32xf32, #tpu.memory_space<vmem>>, %arg3: memref<32x128xf32, #tpu.memory_space<vmem>>, %arg4: memref<16x128xf32, #tpu.memory_space<vmem>>, %arg5: memref<1x128xf32, #tpu.memory_space<vmem>>, %arg6: memref<2x8x32xf32, #tpu.memory_space<vmem>>, %arg7: memref<2x32xf32, #tpu.memory_space<vmem>>, %arg8: memref<2x32xf32, #tpu.memory_space<vmem>>) attributes {dimension_semantics = [], scalar_prefetch = 0 : i64, scratch_operands = 0 : i64, tpu.core_type = #tpu.core_type<tc>} {
    %c0 = arith.constant 0 : index
    %c0_0 = arith.constant 0 : index
    %0 = vector.load %arg3[%c0, %c0_0] : memref<32x128xf32, #tpu.memory_space<vmem>>, vector<32x128xf32>
    %c0_1 = arith.constant 0 : index
    %c0_2 = arith.constant 0 : index
    %1 = vector.load %arg4[%c0_1, %c0_2] : memref<16x128xf32, #tpu.memory_space<vmem>>, vector<16x128xf32>
    %c0_3 = arith.constant 0 : index
    %c0_4 = arith.constant 0 : index
    %2 = vector.load %arg5[%c0_3, %c0_4] : memref<1x128xf32, #tpu.memory_space<vmem>>, vector<1x128xf32>
    %c0_5 = arith.constant 0 : index
    %c0_6 = arith.constant 0 : index
    %3 = vector.load %arg1[%c0_5, %c0_6] : memref<2x32xf32, #tpu.memory_space<vmem>>, vector<2x32xf32>
    %c0_7 = arith.constant 0 : index
    %c0_8 = arith.constant 0 : index
    %4 = vector.load %arg2[%c0_7, %c0_8] : memref<2x32xf32, #tpu.memory_space<vmem>>, vector<2x32xf32>
    %c0_9 = arith.constant 0 : index
    %c0_10 = arith.constant 0 : index
    %c0_11 = arith.constant 0 : index
    %5 = vector.load %arg0[%c0_9, %c0_10, %c0_11] : memref<8x2x16xf32, #tpu.memory_space<vmem>>, vector<1x2x16xf32>
    %6 = vector.shape_cast %5 : vector<1x2x16xf32> to vector<2x16xf32>
    %cst = arith.constant dense<0.000000e+00> : vector<2x128xf32>
    %7 = tpu.matmul %3, %0, %cst {dimension_numbers = #tpu.dot_dimension_numbers<[1], [0], [0], [1], [0, 0, 1, 1], [], []>} : vector<2x32xf32>, vector<32x128xf32>, vector<2x128xf32> -> vector<2x128xf32>
    %cst_12 = arith.constant dense<0.000000e+00> : vector<2x128xf32>
    %8 = tpu.matmul %6, %1, %cst_12 {dimension_numbers = #tpu.dot_dimension_numbers<[1], [0], [0], [1], [0, 0, 1, 1], [], []>} : vector<2x16xf32>, vector<16x128xf32>, vector<2x128xf32> -> vector<2x128xf32>
    %9 = arith.addf %7, %8 : vector<2x128xf32>
    %10 = vector.broadcast %2 : vector<1x128xf32> to vector<2x128xf32>
    %11 = arith.addf %9, %10 : vector<2x128xf32>
    %12 = vector.extract_strided_slice %11 {offsets = [0, 0], sizes = [2, 32], strides = [1, 1]} : vector<2x128xf32> to vector<2x32xf32>
    %13 = arith.negf %12 : vector<2x32xf32>
    %14 = math.exp %13 : vector<2x32xf32>
    %cst_13 = arith.constant 1.000000e+00 : f32
    %15 = vector.broadcast %cst_13 : f32 to vector<2x32xf32>
    %16 = arith.addf %15, %14 : vector<2x32xf32>
    %17 = arith.divf %15, %16 : vector<2x32xf32>
    %18 = vector.extract_strided_slice %11 {offsets = [0, 32], sizes = [2, 32], strides = [1, 1]} : vector<2x128xf32> to vector<2x32xf32>
    %19 = arith.negf %18 : vector<2x32xf32>
    %20 = math.exp %19 : vector<2x32xf32>
    %cst_14 = arith.constant 1.000000e+00 : f32
    %21 = vector.broadcast %cst_14 : f32 to vector<2x32xf32>
    %22 = arith.addf %21, %20 : vector<2x32xf32>
    %23 = arith.divf %21, %22 : vector<2x32xf32>
    %24 = vector.extract_strided_slice %11 {offsets = [0, 64], sizes = [2, 32], strides = [1, 1]} : vector<2x128xf32> to vector<2x32xf32>
    %25 = arith.negf %24 : vector<2x32xf32>
    %26 = math.exp %25 : vector<2x32xf32>
    %cst_15 = arith.constant 1.000000e+00 : f32
    %27 = vector.broadcast %cst_15 : f32 to vector<2x32xf32>
    %28 = arith.addf %27, %26 : vector<2x32xf32>
    %29 = arith.divf %27, %28 : vector<2x32xf32>
    %30 = vector.extract_strided_slice %11 {offsets = [0, 96], sizes = [2, 32], strides = [1, 1]} : vector<2x128xf32> to vector<2x32xf32>
    %31 = math.tanh %30 : vector<2x32xf32>
    %32 = arith.mulf %4, %17 : vector<2x32xf32>
    %33 = arith.mulf %31, %23 : vector<2x32xf32>
    %34 = arith.addf %32, %33 : vector<2x32xf32>
    %35 = math.tanh %34 : vector<2x32xf32>
    %36 = arith.mulf %35, %29 : vector<2x32xf32>
    %c0_16 = arith.constant 0 : index
    %c0_17 = arith.constant 0 : index
    %c0_18 = arith.constant 0 : index
    %37 = vector.load %arg6[%c0_16, %c0_17, %c0_18] : memref<2x8x32xf32, #tpu.memory_space<vmem>>, vector<2x1x32xf32>
    %38 = vector.shape_cast %37 : vector<2x1x32xf32> to vector<2x32xf32>
    %39 = vector.shape_cast %36 : vector<2x32xf32> to vector<2x1x32xf32>
    tpu.vector_store %arg6[%c0_16, %c0_17, %c0_18], %39 {strides = array<i32>} : memref<2x8x32xf32, #tpu.memory_space<vmem>>, vector<2x1x32xf32>,
    %c1 = arith.constant 1 : index
    %c0_19 = arith.constant 0 : index
    %c0_20 = arith.constant 0 : index
    %40 = vector.load %arg0[%c1, %c0_19, %c0_20] : memref<8x2x16xf32, #tpu.memory_space<vmem>>, vector<1x2x16xf32>
    %41 = vector.shape_cast %40 : vector<1x2x16xf32> to vector<2x16xf32>
    %cst_21 = arith.constant dense<0.000000e+00> : vector<2x128xf32>
    %42 = tpu.matmul %36, %0, %cst_21 {dimension_numbers = #tpu.dot_dimension_numbers<[1], [0], [0], [1], [0, 0, 1, 1], [], []>} : vector<2x32xf32>, vector<32x128xf32>, vector<2x128xf32> -> vector<2x128xf32>
    %cst_22 = arith.constant dense<0.000000e+00> : vector<2x128xf32>
    %43 = tpu.matmul %41, %1, %cst_22 {dimension_numbers = #tpu.dot_dimension_numbers<[1], [0], [0], [1], [0, 0, 1, 1], [], []>} : vector<2x16xf32>, vector<16x128xf32>, vector<2x128xf32> -> vector<2x128xf32>
    %44 = arith.addf %42, %43 : vector<2x128xf32>
    %45 = vector.broadcast %2 : vector<1x128xf32> to vector<2x128xf32>
    %46 = arith.addf %44, %45 : vector<2x128xf32>
    %47 = vector.extract_strided_slice %46 {offsets = [0, 0], sizes = [2, 32], strides = [1, 1]} : vector<2x128xf32> to vector<2x32xf32>
    %48 = arith.negf %47 : vector<2x32xf32>
    %49 = math.exp %48 : vector<2x32xf32>
    %cst_23 = arith.constant 1.000000e+00 : f32
    %50 = vector.broadcast %cst_23 : f32 to vector<2x32xf32>
    %51 = arith.addf %50, %49 : vector<2x32xf32>
    %52 = arith.divf %50, %51 : vector<2x32xf32>
    %53 = vector.extract_strided_slice %46 {offsets = [0, 32], sizes = [2, 32], strides = [1, 1]} : vector<2x128xf32> to vector<2x32xf32>
    %54 = arith.negf %53 : vector<2x32xf32>
    %55 = math.exp %54 : vector<2x32xf32>
    %cst_24 = arith.constant 1.000000e+00 : f32
    %56 = vector.broadcast %cst_24 : f32 to vector<2x32xf32>
    %57 = arith.addf %56, %55 : vector<2x32xf32>
    %58 = arith.divf %56, %57 : vector<2x32xf32>
    %59 = vector.extract_strided_slice %46 {offsets = [0, 64], sizes = [2, 32], strides = [1, 1]} : vector<2x128xf32> to vector<2x32xf32>
    %60 = arith.negf %59 : vector<2x32xf32>
    %61 = math.exp %60 : vector<2x32xf32>
    %cst_25 = arith.constant 1.000000e+00 : f32
    %62 = vector.broadcast %cst_25 : f32 to vector<2x32xf32>
    %63 = arith.addf %62, %61 : vector<2x32xf32>
    %64 = arith.divf %62, %63 : vector<2x32xf32>
    %65 = vector.extract_strided_slice %46 {offsets = [0, 96], sizes = [2, 32], strides = [1, 1]} : vector<2x128xf32> to vector<2x32xf32>
    %66 = math.tanh %65 : vector<2x32xf32>
    %67 = arith.mulf %34, %52 : vector<2x32xf32>
    %68 = arith.mulf %66, %58 : vector<2x32xf32>
    %69 = arith.addf %67, %68 : vector<2x32xf32>
    %70 = math.tanh %69 : vector<2x32xf32>
    %71 = arith.mulf %70, %64 : vector<2x32xf32>
    %c0_26 = arith.constant 0 : index
    %c1_27 = arith.constant 1 : index
    %c0_28 = arith.constant 0 : index
    %72 = vector.load %arg6[%c0_26, %c1_27, %c0_28] : memref<2x8x32xf32, #tpu.memory_space<vmem>>, vector<2x1x32xf32>
    %73 = vector.shape_cast %72 : vector<2x1x32xf32> to vector<2x32xf32>
    %74 = vector.shape_cast %71 : vector<2x32xf32> to vector<2x1x32xf32>
    tpu.vector_store %arg6[%c0_26, %c1_27, %c0_28], %74 {strides = array<i32>} : memref<2x8x32xf32, #tpu.memory_space<vmem>>, vector<2x1x32xf32>,
    %c2 = arith.constant 2 : index
    %c0_29 = arith.constant 0 : index
    %c0_30 = arith.constant 0 : index
    %75 = vector.load %arg0[%c2, %c0_29, %c0_30] : memref<8x2x16xf32, #tpu.memory_space<vmem>>, vector<1x2x16xf32>
    %76 = vector.shape_cast %75 : vector<1x2x16xf32> to vector<2x16xf32>
    %cst_31 = arith.constant dense<0.000000e+00> : vector<2x128xf32>
    %77 = tpu.matmul %71, %0, %cst_31 {dimension_numbers = #tpu.dot_dimension_numbers<[1], [0], [0], [1], [0, 0, 1, 1], [], []>} : vector<2x32xf32>, vector<32x128xf32>, vector<2x128xf32> -> vector<2x128xf32>
    %cst_32 = arith.constant dense<0.000000e+00> : vector<2x128xf32>
    %78 = tpu.matmul %76, %1, %cst_32 {dimension_numbers = #tpu.dot_dimension_numbers<[1], [0], [0], [1], [0, 0, 1, 1], [], []>} : vector<2x16xf32>, vector<16x128xf32>, vector<2x128xf32> -> vector<2x128xf32>
    %79 = arith.addf %77, %78 : vector<2x128xf32>
    %80 = vector.broadcast %2 : vector<1x128xf32> to vector<2x128xf32>
    %81 = arith.addf %79, %80 : vector<2x128xf32>
    %82 = vector.extract_strided_slice %81 {offsets = [0, 0], sizes = [2, 32], strides = [1, 1]} : vector<2x128xf32> to vector<2x32xf32>
    %83 = arith.negf %82 : vector<2x32xf32>
    %84 = math.exp %83 : vector<2x32xf32>
    %cst_33 = arith.constant 1.000000e+00 : f32
    %85 = vector.broadcast %cst_33 : f32 to vector<2x32xf32>
    %86 = arith.addf %85, %84 : vector<2x32xf32>
    %87 = arith.divf %85, %86 : vector<2x32xf32>
    %88 = vector.extract_strided_slice %81 {offsets = [0, 32], sizes = [2, 32], strides = [1, 1]} : vector<2x128xf32> to vector<2x32xf32>
    %89 = arith.negf %88 : vector<2x32xf32>
    %90 = math.exp %89 : vector<2x32xf32>
    %cst_34 = arith.constant 1.000000e+00 : f32
    %91 = vector.broadcast %cst_34 : f32 to vector<2x32xf32>
    %92 = arith.addf %91, %90 : vector<2x32xf32>
    %93 = arith.divf %91, %92 : vector<2x32xf32>
    %94 = vector.extract_strided_slice %81 {offsets = [0, 64], sizes = [2, 32], strides = [1, 1]} : vector<2x128xf32> to vector<2x32xf32>
    %95 = arith.negf %94 : vector<2x32xf32>
    %96 = math.exp %95 : vector<2x32xf32>
    %cst_35 = arith.constant 1.000000e+00 : f32
    %97 = vector.broadcast %cst_35 : f32 to vector<2x32xf32>
    %98 = arith.addf %97, %96 : vector<2x32xf32>
    %99 = arith.divf %97, %98 : vector<2x32xf32>
    %100 = vector.extract_strided_slice %81 {offsets = [0, 96], sizes = [2, 32], strides = [1, 1]} : vector<2x128xf32> to vector<2x32xf32>
    %101 = math.tanh %100 : vector<2x32xf32>
    %102 = arith.mulf %69, %87 : vector<2x32xf32>
    %103 = arith.mulf %101, %93 : vector<2x32xf32>
    %104 = arith.addf %102, %103 : vector<2x32xf32>
    %105 = math.tanh %104 : vector<2x32xf32>
    %106 = arith.mulf %105, %99 : vector<2x32xf32>
    %c0_36 = arith.constant 0 : index
    %c2_37 = arith.constant 2 : index
    %c0_38 = arith.constant 0 : index
    %107 = vector.load %arg6[%c0_36, %c2_37, %c0_38] : memref<2x8x32xf32, #tpu.memory_space<vmem>>, vector<2x1x32xf32>
    %108 = vector.shape_cast %107 : vector<2x1x32xf32> to vector<2x32xf32>
    %109 = vector.shape_cast %106 : vector<2x32xf32> to vector<2x1x32xf32>
    tpu.vector_store %arg6[%c0_36, %c2_37, %c0_38], %109 {strides = array<i32>} : memref<2x8x32xf32, #tpu.memory_space<vmem>>, vector<2x1x32xf32>,
    %c3 = arith.constant 3 : index
    %c0_39 = arith.constant 0 : index
    %c0_40 = arith.constant 0 : index
    %110 = vector.load %arg0[%c3, %c0_39, %c0_40] : memref<8x2x16xf32, #tpu.memory_space<vmem>>, vector<1x2x16xf32>
    %111 = vector.shape_cast %110 : vector<1x2x16xf32> to vector<2x16xf32>
    %cst_41 = arith.constant dense<0.000000e+00> : vector<2x128xf32>
    %112 = tpu.matmul %106, %0, %cst_41 {dimension_numbers = #tpu.dot_dimension_numbers<[1], [0], [0], [1], [0, 0, 1, 1], [], []>} : vector<2x32xf32>, vector<32x128xf32>, vector<2x128xf32> -> vector<2x128xf32>
    %cst_42 = arith.constant dense<0.000000e+00> : vector<2x128xf32>
    %113 = tpu.matmul %111, %1, %cst_42 {dimension_numbers = #tpu.dot_dimension_numbers<[1], [0], [0], [1], [0, 0, 1, 1], [], []>} : vector<2x16xf32>, vector<16x128xf32>, vector<2x128xf32> -> vector<2x128xf32>
    %114 = arith.addf %112, %113 : vector<2x128xf32>
    %115 = vector.broadcast %2 : vector<1x128xf32> to vector<2x128xf32>
    %116 = arith.addf %114, %115 : vector<2x128xf32>
    %117 = vector.extract_strided_slice %116 {offsets = [0, 0], sizes = [2, 32], strides = [1, 1]} : vector<2x128xf32> to vector<2x32xf32>
    %118 = arith.negf %117 : vector<2x32xf32>
    %119 = math.exp %118 : vector<2x32xf32>
    %cst_43 = arith.constant 1.000000e+00 : f32
    %120 = vector.broadcast %cst_43 : f32 to vector<2x32xf32>
    %121 = arith.addf %120, %119 : vector<2x32xf32>
    %122 = arith.divf %120, %121 : vector<2x32xf32>
    %123 = vector.extract_strided_slice %116 {offsets = [0, 32], sizes = [2, 32], strides = [1, 1]} : vector<2x128xf32> to vector<2x32xf32>
    %124 = arith.negf %123 : vector<2x32xf32>
    %125 = math.exp %124 : vector<2x32xf32>
    %cst_44 = arith.constant 1.000000e+00 : f32
    %126 = vector.broadcast %cst_44 : f32 to vector<2x32xf32>
    %127 = arith.addf %126, %125 : vector<2x32xf32>
    %128 = arith.divf %126, %127 : vector<2x32xf32>
    %129 = vector.extract_strided_slice %116 {offsets = [0, 64], sizes = [2, 32], strides = [1, 1]} : vector<2x128xf32> to vector<2x32xf32>
    %130 = arith.negf %129 : vector<2x32xf32>
    %131 = math.exp %130 : vector<2x32xf32>
    %cst_45 = arith.constant 1.000000e+00 : f32
    %132 = vector.broadcast %cst_45 : f32 to vector<2x32xf32>
    %133 = arith.addf %132, %131 : vector<2x32xf32>
    %134 = arith.divf %132, %133 : vector<2x32xf32>
    %135 = vector.extract_strided_slice %116 {offsets = [0, 96], sizes = [2, 32], strides = [1, 1]} : vector<2x128xf32> to vector<2x32xf32>
    %136 = math.tanh %135 : vector<2x32xf32>
    %137 = arith.mulf %104, %122 : vector<2x32xf32>
    %138 = arith.mulf %136, %128 : vector<2x32xf32>
    %139 = arith.addf %137, %138 : vector<2x32xf32>
    %140 = math.tanh %139 : vector<2x32xf32>
    %141 = arith.mulf %140, %134 : vector<2x32xf32>
    %c0_46 = arith.constant 0 : index
    %c3_47 = arith.constant 3 : index
    %c0_48 = arith.constant 0 : index
    %142 = vector.load %arg6[%c0_46, %c3_47, %c0_48] : memref<2x8x32xf32, #tpu.memory_space<vmem>>, vector<2x1x32xf32>
    %143 = vector.shape_cast %142 : vector<2x1x32xf32> to vector<2x32xf32>
    %144 = vector.shape_cast %141 : vector<2x32xf32> to vector<2x1x32xf32>
    tpu.vector_store %arg6[%c0_46, %c3_47, %c0_48], %144 {strides = array<i32>} : memref<2x8x32xf32, #tpu.memory_space<vmem>>, vector<2x1x32xf32>,
    %c4 = arith.constant 4 : index
    %c0_49 = arith.constant 0 : index
    %c0_50 = arith.constant 0 : index
    %145 = vector.load %arg0[%c4, %c0_49, %c0_50] : memref<8x2x16xf32, #tpu.memory_space<vmem>>, vector<1x2x16xf32>
    %146 = vector.shape_cast %145 : vector<1x2x16xf32> to vector<2x16xf32>
    %cst_51 = arith.constant dense<0.000000e+00> : vector<2x128xf32>
    %147 = tpu.matmul %141, %0, %cst_51 {dimension_numbers = #tpu.dot_dimension_numbers<[1], [0], [0], [1], [0, 0, 1, 1], [], []>} : vector<2x32xf32>, vector<32x128xf32>, vector<2x128xf32> -> vector<2x128xf32>
    %cst_52 = arith.constant dense<0.000000e+00> : vector<2x128xf32>
    %148 = tpu.matmul %146, %1, %cst_52 {dimension_numbers = #tpu.dot_dimension_numbers<[1], [0], [0], [1], [0, 0, 1, 1], [], []>} : vector<2x16xf32>, vector<16x128xf32>, vector<2x128xf32> -> vector<2x128xf32>
    %149 = arith.addf %147, %148 : vector<2x128xf32>
    %150 = vector.broadcast %2 : vector<1x128xf32> to vector<2x128xf32>
    %151 = arith.addf %149, %150 : vector<2x128xf32>
    %152 = vector.extract_strided_slice %151 {offsets = [0, 0], sizes = [2, 32], strides = [1, 1]} : vector<2x128xf32> to vector<2x32xf32>
    %153 = arith.negf %152 : vector<2x32xf32>
    %154 = math.exp %153 : vector<2x32xf32>
    %cst_53 = arith.constant 1.000000e+00 : f32
    %155 = vector.broadcast %cst_53 : f32 to vector<2x32xf32>
    %156 = arith.addf %155, %154 : vector<2x32xf32>
    %157 = arith.divf %155, %156 : vector<2x32xf32>
    %158 = vector.extract_strided_slice %151 {offsets = [0, 32], sizes = [2, 32], strides = [1, 1]} : vector<2x128xf32> to vector<2x32xf32>
    %159 = arith.negf %158 : vector<2x32xf32>
    %160 = math.exp %159 : vector<2x32xf32>
    %cst_54 = arith.constant 1.000000e+00 : f32
    %161 = vector.broadcast %cst_54 : f32 to vector<2x32xf32>
    %162 = arith.addf %161, %160 : vector<2x32xf32>
    %163 = arith.divf %161, %162 : vector<2x32xf32>
    %164 = vector.extract_strided_slice %151 {offsets = [0, 64], sizes = [2, 32], strides = [1, 1]} : vector<2x128xf32> to vector<2x32xf32>
    %165 = arith.negf %164 : vector<2x32xf32>
    %166 = math.exp %165 : vector<2x32xf32>
    %cst_55 = arith.constant 1.000000e+00 : f32
    %167 = vector.broadcast %cst_55 : f32 to vector<2x32xf32>
    %168 = arith.addf %167, %166 : vector<2x32xf32>
    %169 = arith.divf %167, %168 : vector<2x32xf32>
    %170 = vector.extract_strided_slice %151 {offsets = [0, 96], sizes = [2, 32], strides = [1, 1]} : vector<2x128xf32> to vector<2x32xf32>
    %171 = math.tanh %170 : vector<2x32xf32>
    %172 = arith.mulf %139, %157 : vector<2x32xf32>
    %173 = arith.mulf %171, %163 : vector<2x32xf32>
    %174 = arith.addf %172, %173 : vector<2x32xf32>
    %175 = math.tanh %174 : vector<2x32xf32>
    %176 = arith.mulf %175, %169 : vector<2x32xf32>
    %c0_56 = arith.constant 0 : index
    %c4_57 = arith.constant 4 : index
    %c0_58 = arith.constant 0 : index
    %177 = vector.load %arg6[%c0_56, %c4_57, %c0_58] : memref<2x8x32xf32, #tpu.memory_space<vmem>>, vector<2x1x32xf32>
    %178 = vector.shape_cast %177 : vector<2x1x32xf32> to vector<2x32xf32>
    %179 = vector.shape_cast %176 : vector<2x32xf32> to vector<2x1x32xf32>
    tpu.vector_store %arg6[%c0_56, %c4_57, %c0_58], %179 {strides = array<i32>} : memref<2x8x32xf32, #tpu.memory_space<vmem>>, vector<2x1x32xf32>,
    %c5 = arith.constant 5 : index
    %c0_59 = arith.constant 0 : index
    %c0_60 = arith.constant 0 : index
    %180 = vector.load %arg0[%c5, %c0_59, %c0_60] : memref<8x2x16xf32, #tpu.memory_space<vmem>>, vector<1x2x16xf32>
    %181 = vector.shape_cast %180 : vector<1x2x16xf32> to vector<2x16xf32>
    %cst_61 = arith.constant dense<0.000000e+00> : vector<2x128xf32>
    %182 = tpu.matmul %176, %0, %cst_61 {dimension_numbers = #tpu.dot_dimension_numbers<[1], [0], [0], [1], [0, 0, 1, 1], [], []>} : vector<2x32xf32>, vector<32x128xf32>, vector<2x128xf32> -> vector<2x128xf32>
    %cst_62 = arith.constant dense<0.000000e+00> : vector<2x128xf32>
    %183 = tpu.matmul %181, %1, %cst_62 {dimension_numbers = #tpu.dot_dimension_numbers<[1], [0], [0], [1], [0, 0, 1, 1], [], []>} : vector<2x16xf32>, vector<16x128xf32>, vector<2x128xf32> -> vector<2x128xf32>
    %184 = arith.addf %182, %183 : vector<2x128xf32>
    %185 = vector.broadcast %2 : vector<1x128xf32> to vector<2x128xf32>
    %186 = arith.addf %184, %185 : vector<2x128xf32>
    %187 = vector.extract_strided_slice %186 {offsets = [0, 0], sizes = [2, 32], strides = [1, 1]} : vector<2x128xf32> to vector<2x32xf32>
    %188 = arith.negf %187 : vector<2x32xf32>
    %189 = math.exp %188 : vector<2x32xf32>
    %cst_63 = arith.constant 1.000000e+00 : f32
    %190 = vector.broadcast %cst_63 : f32 to vector<2x32xf32>
    %191 = arith.addf %190, %189 : vector<2x32xf32>
    %192 = arith.divf %190, %191 : vector<2x32xf32>
    %193 = vector.extract_strided_slice %186 {offsets = [0, 32], sizes = [2, 32], strides = [1, 1]} : vector<2x128xf32> to vector<2x32xf32>
    %194 = arith.negf %193 : vector<2x32xf32>
    %195 = math.exp %194 : vector<2x32xf32>
    %cst_64 = arith.constant 1.000000e+00 : f32
    %196 = vector.broadcast %cst_64 : f32 to vector<2x32xf32>
    %197 = arith.addf %196, %195 : vector<2x32xf32>
    %198 = arith.divf %196, %197 : vector<2x32xf32>
    %199 = vector.extract_strided_slice %186 {offsets = [0, 64], sizes = [2, 32], strides = [1, 1]} : vector<2x128xf32> to vector<2x32xf32>
    %200 = arith.negf %199 : vector<2x32xf32>
    %201 = math.exp %200 : vector<2x32xf32>
    %cst_65 = arith.constant 1.000000e+00 : f32
    %202 = vector.broadcast %cst_65 : f32 to vector<2x32xf32>
    %203 = arith.addf %202, %201 : vector<2x32xf32>
    %204 = arith.divf %202, %203 : vector<2x32xf32>
    %205 = vector.extract_strided_slice %186 {offsets = [0, 96], sizes = [2, 32], strides = [1, 1]} : vector<2x128xf32> to vector<2x32xf32>
    %206 = math.tanh %205 : vector<2x32xf32>
    %207 = arith.mulf %174, %192 : vector<2x32xf32>
    %208 = arith.mulf %206, %198 : vector<2x32xf32>
    %209 = arith.addf %207, %208 : vector<2x32xf32>
    %210 = math.tanh %209 : vector<2x32xf32>
    %211 = arith.mulf %210, %204 : vector<2x32xf32>
    %c0_66 = arith.constant 0 : index
    %c5_67 = arith.constant 5 : index
    %c0_68 = arith.constant 0 : index
    %212 = vector.load %arg6[%c0_66, %c5_67, %c0_68] : memref<2x8x32xf32, #tpu.memory_space<vmem>>, vector<2x1x32xf32>
    %213 = vector.shape_cast %212 : vector<2x1x32xf32> to vector<2x32xf32>
    %214 = vector.shape_cast %211 : vector<2x32xf32> to vector<2x1x32xf32>
    tpu.vector_store %arg6[%c0_66, %c5_67, %c0_68], %214 {strides = array<i32>} : memref<2x8x32xf32, #tpu.memory_space<vmem>>, vector<2x1x32xf32>,
    %c6 = arith.constant 6 : index
    %c0_69 = arith.constant 0 : index
    %c0_70 = arith.constant 0 : index
    %215 = vector.load %arg0[%c6, %c0_69, %c0_70] : memref<8x2x16xf32, #tpu.memory_space<vmem>>, vector<1x2x16xf32>
    %216 = vector.shape_cast %215 : vector<1x2x16xf32> to vector<2x16xf32>
    %cst_71 = arith.constant dense<0.000000e+00> : vector<2x128xf32>
    %217 = tpu.matmul %211, %0, %cst_71 {dimension_numbers = #tpu.dot_dimension_numbers<[1], [0], [0], [1], [0, 0, 1, 1], [], []>} : vector<2x32xf32>, vector<32x128xf32>, vector<2x128xf32> -> vector<2x128xf32>
    %cst_72 = arith.constant dense<0.000000e+00> : vector<2x128xf32>
    %218 = tpu.matmul %216, %1, %cst_72 {dimension_numbers = #tpu.dot_dimension_numbers<[1], [0], [0], [1], [0, 0, 1, 1], [], []>} : vector<2x16xf32>, vector<16x128xf32>, vector<2x128xf32> -> vector<2x128xf32>
    %219 = arith.addf %217, %218 : vector<2x128xf32>
    %220 = vector.broadcast %2 : vector<1x128xf32> to vector<2x128xf32>
    %221 = arith.addf %219, %220 : vector<2x128xf32>
    %222 = vector.extract_strided_slice %221 {offsets = [0, 0], sizes = [2, 32], strides = [1, 1]} : vector<2x128xf32> to vector<2x32xf32>
    %223 = arith.negf %222 : vector<2x32xf32>
    %224 = math.exp %223 : vector<2x32xf32>
    %cst_73 = arith.constant 1.000000e+00 : f32
    %225 = vector.broadcast %cst_73 : f32 to vector<2x32xf32>
    %226 = arith.addf %225, %224 : vector<2x32xf32>
    %227 = arith.divf %225, %226 : vector<2x32xf32>
    %228 = vector.extract_strided_slice %221 {offsets = [0, 32], sizes = [2, 32], strides = [1, 1]} : vector<2x128xf32> to vector<2x32xf32>
    %229 = arith.negf %228 : vector<2x32xf32>
    %230 = math.exp %229 : vector<2x32xf32>
    %cst_74 = arith.constant 1.000000e+00 : f32
    %231 = vector.broadcast %cst_74 : f32 to vector<2x32xf32>
    %232 = arith.addf %231, %230 : vector<2x32xf32>
    %233 = arith.divf %231, %232 : vector<2x32xf32>
    %234 = vector.extract_strided_slice %221 {offsets = [0, 64], sizes = [2, 32], strides = [1, 1]} : vector<2x128xf32> to vector<2x32xf32>
    %235 = arith.negf %234 : vector<2x32xf32>
    %236 = math.exp %235 : vector<2x32xf32>
    %cst_75 = arith.constant 1.000000e+00 : f32
    %237 = vector.broadcast %cst_75 : f32 to vector<2x32xf32>
    %238 = arith.addf %237, %236 : vector<2x32xf32>
    %239 = arith.divf %237, %238 : vector<2x32xf32>
    %240 = vector.extract_strided_slice %221 {offsets = [0, 96], sizes = [2, 32], strides = [1, 1]} : vector<2x128xf32> to vector<2x32xf32>
    %241 = math.tanh %240 : vector<2x32xf32>
    %242 = arith.mulf %209, %227 : vector<2x32xf32>
    %243 = arith.mulf %241, %233 : vector<2x32xf32>
    %244 = arith.addf %242, %243 : vector<2x32xf32>
    %245 = math.tanh %244 : vector<2x32xf32>
    %246 = arith.mulf %245, %239 : vector<2x32xf32>
    %c0_76 = arith.constant 0 : index
    %c6_77 = arith.constant 6 : index
    %c0_78 = arith.constant 0 : index
    %247 = vector.load %arg6[%c0_76, %c6_77, %c0_78] : memref<2x8x32xf32, #tpu.memory_space<vmem>>, vector<2x1x32xf32>
    %248 = vector.shape_cast %247 : vector<2x1x32xf32> to vector<2x32xf32>
    %249 = vector.shape_cast %246 : vector<2x32xf32> to vector<2x1x32xf32>
    tpu.vector_store %arg6[%c0_76, %c6_77, %c0_78], %249 {strides = array<i32>} : memref<2x8x32xf32, #tpu.memory_space<vmem>>, vector<2x1x32xf32>,
    %c7 = arith.constant 7 : index
    %c0_79 = arith.constant 0 : index
    %c0_80 = arith.constant 0 : index
    %250 = vector.load %arg0[%c7, %c0_79, %c0_80] : memref<8x2x16xf32, #tpu.memory_space<vmem>>, vector<1x2x16xf32>
    %251 = vector.shape_cast %250 : vector<1x2x16xf32> to vector<2x16xf32>
    %cst_81 = arith.constant dense<0.000000e+00> : vector<2x128xf32>
    %252 = tpu.matmul %246, %0, %cst_81 {dimension_numbers = #tpu.dot_dimension_numbers<[1], [0], [0], [1], [0, 0, 1, 1], [], []>} : vector<2x32xf32>, vector<32x128xf32>, vector<2x128xf32> -> vector<2x128xf32>
    %cst_82 = arith.constant dense<0.000000e+00> : vector<2x128xf32>
    %253 = tpu.matmul %251, %1, %cst_82 {dimension_numbers = #tpu.dot_dimension_numbers<[1], [0], [0], [1], [0, 0, 1, 1], [], []>} : vector<2x16xf32>, vector<16x128xf32>, vector<2x128xf32> -> vector<2x128xf32>
    %254 = arith.addf %252, %253 : vector<2x128xf32>
    %255 = vector.broadcast %2 : vector<1x128xf32> to vector<2x128xf32>
    %256 = arith.addf %254, %255 : vector<2x128xf32>
    %257 = vector.extract_strided_slice %256 {offsets = [0, 0], sizes = [2, 32], strides = [1, 1]} : vector<2x128xf32> to vector<2x32xf32>
    %258 = arith.negf %257 : vector<2x32xf32>
    %259 = math.exp %258 : vector<2x32xf32>
    %cst_83 = arith.constant 1.000000e+00 : f32
    %260 = vector.broadcast %cst_83 : f32 to vector<2x32xf32>
    %261 = arith.addf %260, %259 : vector<2x32xf32>
    %262 = arith.divf %260, %261 : vector<2x32xf32>
    %263 = vector.extract_strided_slice %256 {offsets = [0, 32], sizes = [2, 32], strides = [1, 1]} : vector<2x128xf32> to vector<2x32xf32>
    %264 = arith.negf %263 : vector<2x32xf32>
    %265 = math.exp %264 : vector<2x32xf32>
    %cst_84 = arith.constant 1.000000e+00 : f32
    %266 = vector.broadcast %cst_84 : f32 to vector<2x32xf32>
    %267 = arith.addf %266, %265 : vector<2x32xf32>
    %268 = arith.divf %266, %267 : vector<2x32xf32>
    %269 = vector.extract_strided_slice %256 {offsets = [0, 64], sizes = [2, 32], strides = [1, 1]} : vector<2x128xf32> to vector<2x32xf32>
    %270 = arith.negf %269 : vector<2x32xf32>
    %271 = math.exp %270 : vector<2x32xf32>
    %cst_85 = arith.constant 1.000000e+00 : f32
    %272 = vector.broadcast %cst_85 : f32 to vector<2x32xf32>
    %273 = arith.addf %272, %271 : vector<2x32xf32>
    %274 = arith.divf %272, %273 : vector<2x32xf32>
    %275 = vector.extract_strided_slice %256 {offsets = [0, 96], sizes = [2, 32], strides = [1, 1]} : vector<2x128xf32> to vector<2x32xf32>
    %276 = math.tanh %275 : vector<2x32xf32>
    %277 = arith.mulf %244, %262 : vector<2x32xf32>
    %278 = arith.mulf %276, %268 : vector<2x32xf32>
    %279 = arith.addf %277, %278 : vector<2x32xf32>
    %280 = math.tanh %279 : vector<2x32xf32>
    %281 = arith.mulf %280, %274 : vector<2x32xf32>
    %c0_86 = arith.constant 0 : index
    %c7_87 = arith.constant 7 : index
    %c0_88 = arith.constant 0 : index
    %282 = vector.load %arg6[%c0_86, %c7_87, %c0_88] : memref<2x8x32xf32, #tpu.memory_space<vmem>>, vector<2x1x32xf32>
    %283 = vector.shape_cast %282 : vector<2x1x32xf32> to vector<2x32xf32>
    %284 = vector.shape_cast %281 : vector<2x32xf32> to vector<2x1x32xf32>
    tpu.vector_store %arg6[%c0_86, %c7_87, %c0_88], %284 {strides = array<i32>} : memref<2x8x32xf32, #tpu.memory_space<vmem>>, vector<2x1x32xf32>,
    %c0_89 = arith.constant 0 : index
    %c0_90 = arith.constant 0 : index
    %285 = vector.load %arg7[%c0_89, %c0_90] : memref<2x32xf32, #tpu.memory_space<vmem>>, vector<2x32xf32>
    tpu.vector_store %arg7[%c0_89, %c0_90], %281 {strides = array<i32>} : memref<2x32xf32, #tpu.memory_space<vmem>>, vector<2x32xf32>,
    %c0_91 = arith.constant 0 : index
    %c0_92 = arith.constant 0 : index
    %286 = vector.load %arg8[%c0_91, %c0_92] : memref<2x32xf32, #tpu.memory_space<vmem>>, vector<2x32xf32>
    tpu.vector_store %arg8[%c0_91, %c0_92], %279 {strides = array<i32>} : memref<2x32xf32, #tpu.memory_space<vmem>>, vector<2x32xf32>,
    return
  }
}

</mosaic_0001>

<llo_original>
// kernel: tpu_custom_call.1
$region0: #{tpu_custom_call.1}
  #allocation0 [shape = 'u32[]', space=smem, size = 0x4, offset = 0x4, fixed_abs, tag = 'smem constant byte address 0x4 - core index']
  #allocation1 [shape = 'u32[144,128]{1,0:T(1,128)}', space=vmem, size = 0x12000, scoped, tag = 'internal scratch']
  %s0 = inlined_call_operand.hbm [shape: f32[8,2,16], index: 0, kind: input, shape index: {}]
  %s1 = inlined_call_operand.hbm [shape: f32[2,32], index: 1, kind: input, shape index: {}]
  %s2 = inlined_call_operand.vmem [shape: f32[2,32], index: 2, kind: input, shape index: {}]
  %s3 = inlined_call_operand.hbm [shape: f32[32,128], index: 3, kind: input, shape index: {}]
  %s4 = inlined_call_operand.hbm [shape: f32[16,128], index: 4, kind: input, shape index: {}]
  %s5 = inlined_call_operand.vmem [shape: f32[1,128], index: 5, kind: input, shape index: {}]
  %s6 = inlined_call_operand.hbm [shape: f32[2,8,32], index: 6, kind: output, shape index: {0}]
  %s7 = inlined_call_operand.hbm [shape: f32[2,32], index: 7, kind: output, shape index: {1}]
  %s8 = inlined_call_operand.hbm [shape: f32[2,32], index: 8, kind: output, shape index: {2}]
  %9 = xla_tuple %s6, %s7, %s8
  %s10 = sld [smem:[#allocation0]]
  $region66: #{tpu_custom_call.1} parent=0
    _
  %s12 = ssub.s32 1, %s10
  %s13 = scalar_select 0, %s12, %s10
  $region1: #{tpu_custom_call.1} parent=0
    #allocation2 [shape = 'u8[8192]{0}', space=vmem, size = 0x2000, scoped, tag = 'input window, operand 0, single buffered']
    #allocation3 [shape = 's32[1]{0}', space=sflag, size = 0x4, scoped, tag = 'scoped memory for tpu_custom_call.1']
    #allocation4 [shape = 's32[1]{0}', space=sflag, size = 0x4, scoped, tag = 'scoped memory for tpu_custom_call.1']
    #allocation5 [shape = 'u8[1024]{0}', space=vmem, size = 0x400, scoped, tag = 'input window, operand 1, single buffered']
    #allocation6 [shape = 's32[1]{0}', space=sflag, size = 0x4, scoped, tag = 'scoped memory for tpu_custom_call.1']
    #allocation7 [shape = 'u8[16384]{0}', space=vmem, size = 0x4000, scoped, tag = 'input window, operand 3, single buffered']
    #allocation8 [shape = 'u8[8192]{0}', space=vmem, size = 0x2000, scoped, tag = 'input window, operand 4, single buffered']
    #allocation9 [shape = 's32[1]{0}', space=sflag, size = 0x4, scoped, tag = 'scoped memory for tpu_custom_call.1']
    #allocation10 [shape = 'u8[8192]{0}', space=vmem, size = 0x2000, scoped, tag = 'output window, operand 0, single buffered']
    #allocation11 [shape = 'u8[1024]{0}', space=vmem, size = 0x400, scoped, tag = 'output window, operand 1, single buffered']
    #allocation12 [shape = 's32[1]{0}', space=sflag, size = 0x4, scoped, tag = 'scoped memory for tpu_custom_call.1']
    #allocation13 [shape = 'u8[1024]{0}', space=vmem, size = 0x400, scoped, tag = 'output window, operand 2, single buffered']
    %14 = vsyncpa [#allocation3], 0
    %15 = vsyncpa [#allocation6], 0
    %16 = vsyncpa [#allocation9], 0
    %17 = vsyncpa [#allocation4], 0
    %18 = vsyncpa [#allocation12], 0
    // Predicated region
    $region2: #{tpu_custom_call.1} parent=1 // pred_check
      _
    $region3: #{tpu_custom_call.1} parent=1 // pred_check_branch
      %20 = sbr.rel (0) target = $region5
    $region4: #{tpu_custom_call.1} parent=1 // pred_region
      %s22 = ssub.s32 256, 256
      %23 = vsyncadd [#allocation3], %s22
      %s24 = sshll.u32 [#allocation2], 4
      %s25 = int_to_ptr.vmem [resolvable:$true] %s24
      %30 = dma.hbm_to_vmem [thread:$0]  %s0, 256, %s25, [#allocation3], 32, 32, 2
    $region5: #{tpu_custom_call.1} parent=1 // pred_fallthru
      _
    // Predicated region
    $region6: #{tpu_custom_call.1} parent=1 // pred_check
      _
    $region7: #{tpu_custom_call.1} parent=1 // pred_check_branch
      %32 = sbr.rel (0) target = $region9
    $region8: #{tpu_custom_call.1} parent=1 // pred_region
      %s34 = ssub.s32 32, 32
      %35 = vsyncadd [#allocation6], %s34
      %s37 = sshll.u32 [#allocation5], 4
      %s38 = int_to_ptr.vmem [resolvable:$true] %s37
      %40 = dma.hbm_to_vmem [thread:$0]  %s1, 32, %s38, [#allocation6]
    $region9: #{tpu_custom_call.1} parent=1 // pred_fallthru
      _
    // Predicated region
    $region10: #{tpu_custom_call.1} parent=1 // pred_check
      _
    $region11: #{tpu_custom_call.1} parent=1 // pred_check_branch
      %42 = sbr.rel (0) target = $region13
    $region12: #{tpu_custom_call.1} parent=1 // pred_region
      _
    $region13: #{tpu_custom_call.1} parent=1 // pred_fallthru
      _
    // Predicated region
    $region14: #{tpu_custom_call.1} parent=1 // pred_check
      _
    $region15: #{tpu_custom_call.1} parent=1 // pred_check_branch
      %44 = sbr.rel (0) target = $region17
    $region16: #{tpu_custom_call.1} parent=1 // pred_region
      %s46 = ssub.s32 512, 512
      %47 = vsyncadd [#allocation6], %s46
      %s48 = sshll.u32 [#allocation7], 4
      %s49 = int_to_ptr.vmem [resolvable:$true] %s48
      %54 = dma.hbm_to_vmem [thread:$0]  %s3, 512, %s49, [#allocation6], 128, 128, 8
    $region17: #{tpu_custom_call.1} parent=1 // pred_fallthru
      _
    // Predicated region
    $region18: #{tpu_custom_call.1} parent=1 // pred_check
      _
    $region19: #{tpu_custom_call.1} parent=1 // pred_check_branch
      %56 = sbr.rel (0) target = $region21
    $region20: #{tpu_custom_call.1} parent=1 // pred_region
      %s58 = ssub.s32 256, 256
      %59 = vsyncadd [#allocation9], %s58
      %s60 = sshll.u32 [#allocation8], 4
      %s61 = int_to_ptr.vmem [resolvable:$true] %s60
      %66 = dma.hbm_to_vmem [thread:$0]  %s4, 256, %s61, [#allocation9], 128, 128, 8
    $region21: #{tpu_custom_call.1} parent=1 // pred_fallthru
      _
    // Predicated region
    $region22: #{tpu_custom_call.1} parent=1 // pred_check
      _
    $region23: #{tpu_custom_call.1} parent=1 // pred_check_branch
      %68 = sbr.rel (0) target = $region25
    $region24: #{tpu_custom_call.1} parent=1 // pred_region
      _
    $region25: #{tpu_custom_call.1} parent=1 // pred_fallthru
      _
    // Predicated region
    $region26: #{tpu_custom_call.1} parent=1 // pred_check
      _
    $region27: #{tpu_custom_call.1} parent=1 // pred_check_branch
      %70 = sbr.rel (0) target = $region29
    $region28: #{tpu_custom_call.1} parent=1 // pred_region
      %71 = dma.done [#allocation3], 256
    $region29: #{tpu_custom_call.1} parent=1 // pred_fallthru
      _
    // Predicated region
    $region30: #{tpu_custom_call.1} parent=1 // pred_check
      _
    $region31: #{tpu_custom_call.1} parent=1 // pred_check_branch
      %73 = sbr.rel (0) target = $region33
    $region32: #{tpu_custom_call.1} parent=1 // pred_region
      %74 = dma.done [#allocation6], 32
    $region33: #{tpu_custom_call.1} parent=1 // pred_fallthru
      _
    // Predicated region
    $region34: #{tpu_custom_call.1} parent=1 // pred_check
      _
    $region35: #{tpu_custom_call.1} parent=1 // pred_check_branch
      %76 = sbr.rel (0) target = $region37
    $region36: #{tpu_custom_call.1} parent=1 // pred_region
      %77 = dma.done [#allocation6], 512
    $region37: #{tpu_custom_call.1} parent=1 // pred_fallthru
      _
    // Predicated region
    $region38: #{tpu_custom_call.1} parent=1 // pred_check
      _
    $region39: #{tpu_custom_call.1} parent=1 // pred_check_branch
      %79 = sbr.rel (0) target = $region41
    $region40: #{tpu_custom_call.1} parent=1 // pred_region
      %80 = dma.done [#allocation9], 256
    $region41: #{tpu_custom_call.1} parent=1 // pred_fallthru
      _
    %v81 = vld [vmem:[#allocation7] sm:$0xff]
    %v82 = vld [vmem:[#allocation7 + $0x8] sm:$0xff]
    %v83 = vld [vmem:[#allocation7 + $0x10] sm:$0xff]
    %v84 = vld [vmem:[#allocation7 + $0x18] sm:$0xff]
    %v85 = vld [vmem:[#allocation8] sm:$0xff]
    %v86 = vld [vmem:[#allocation8 + $0x8] sm:$0xff]
    %v87 = vld [vmem:[%s5] sm:$0x1]
    %v88 = vld [vmem:[#allocation5] sm:$0x3]
    %v89 = vld [vmem:[%s2] sm:$0x3]
    %v90 = vld [vmem:[#allocation2] sm:$0x3]
    %vm91 = vcmask 130048
    %v93 = vsel %vm91, %v90, 0
    %95 = vmatprep.subr.mxu0 0.0
    %96 = vmatpush1.msra.mxu0 0.0
    %97 = vmatprep.subr.mxu0 0.0
    %98 = vmatpush1.msra.mxu0 0.0
    %99 = vmatprep.subr.mxu0 0.0
    %100 = vmatpush1.msra.mxu0 0.0
    %101 = vmatprep.subr.mxu0 0.0
    %102 = vmatpush1.msra.mxu0 0.0
    %103 = vmatprep.subr.mxu0 0.0
    %104 = vmatpush1.msra.mxu0 0.0
    %105 = vmatprep.subr.mxu0 0.0
    %106 = vmatpush1.msra.mxu0 0.0
    %107 = vmatprep.subr.mxu0 0.0
    %108 = vmatpush1.msra.mxu0 0.0
    %109 = vmatprep.subr.mxu0 0.0
    %110 = vmatpush1.msra.mxu0 0.0
    %111 = vmatprep.subr.mxu0 0.0
    %112 = vmatpush1.msra.mxu0 0.0
    %113 = vmatprep.subr.mxu0 0.0
    %114 = vmatpush1.msra.mxu0 0.0
    %115 = vmatprep.subr.mxu0 0.0
    %116 = vmatpush1.msra.mxu0 0.0
    %117 = vmatprep.subr.mxu0 0.0
    %118 = vmatpush1.msra.mxu0 0.0
    %119 = vmatprep.subr.mxu0 0.0
    %120 = vmatpush1.msra.mxu0 0.0
    %121 = vmatprep.subr.mxu0 0.0
    %122 = vmatpush1.msra.mxu0 0.0
    %123 = vmatprep.subr.mxu0 0.0
    %124 = vmatpush1.msra.mxu0 %v86
    %125 = vmatprep.subr.mxu0 0.0
    %126 = vmatpush1.msra.mxu0 %v85
    %127 = vmatprep.subr.mxu0 0.0
    %128 = vmatpush2.msra.mxu0 0.0
    %129 = vmatprep.subr.mxu0 0.0
    %130 = vmatpush2.msra.mxu0 0.0
    %131 = vmatprep.subr.mxu0 0.0
    %132 = vmatpush2.msra.mxu0 0.0
    %133 = vmatprep.subr.mxu0 0.0
    %134 = vmatpush2.msra.mxu0 0.0
    %135 = vmatprep.subr.mxu0 0.0
    %136 = vmatpush2.msra.mxu0 0.0
    %137 = vmatprep.subr.mxu0 0.0
    %138 = vmatpush2.msra.mxu0 0.0
    %139 = vmatprep.subr.mxu0 0.0
    %140 = vmatpush2.msra.mxu0 0.0
    %141 = vmatprep.subr.mxu0 0.0
    %142 = vmatpush2.msra.mxu0 0.0
    %143 = vmatprep.subr.mxu0 0.0
    %144 = vmatpush2.msra.mxu0 0.0
    %145 = vmatprep.subr.mxu0 0.0
    %146 = vmatpush2.msra.mxu0 0.0
    %147 = vmatprep.subr.mxu0 0.0
    %148 = vmatpush2.msra.mxu0 0.0
    %149 = vmatprep.subr.mxu0 0.0
    %150 = vmatpush2.msra.mxu0 0.0
    %151 = vmatprep.subr.mxu0 0.0
    %152 = vmatpush2.msra.mxu0 0.0
    %153 = vmatprep.subr.mxu0 0.0
    %154 = vmatpush2.msra.mxu0 0.0
    %155 = vmatprep.subr.mxu0 0.0
    %156 = vmatpush2.msra.mxu0 0.0
    %157 = vmatprep.subr.mxu0 0.0
    %158 = vmatpush2.msra.mxu0 0.0
    %159 = vmatprep.mubr.f32.mxu0 0.0
    %160 = vmatmul.mubr.f32.gmra.mxu0 %v93
    %v161 = vpop.f32.mrf.mxu0
    %v162 = vadd.f32 0.0, %v161
    %v163 = vpop.f32.mrf.mxu0
    %164 = vdwg.mxu0
    %vm165 = vcmask 261120
    %v167 = vsel %vm165, %v88, 0
    %169 = vmatprep.subr.mxu0 0.0
    %170 = vmatpush1.msra.mxu0 0.0
    %171 = vmatprep.subr.mxu0 0.0
    %172 = vmatpush1.msra.mxu0 0.0
    %173 = vmatprep.subr.mxu0 0.0
    %174 = vmatpush1.msra.mxu0 0.0
    %175 = vmatprep.subr.mxu0 0.0
    %176 = vmatpush1.msra.mxu0 0.0
    %177 = vmatprep.subr.mxu0 0.0
    %178 = vmatpush1.msra.mxu0 0.0
    %179 = vmatprep.subr.mxu0 0.0
    %180 = vmatpush1.msra.mxu0 0.0
    %181 = vmatprep.subr.mxu0 0.0
    %182 = vmatpush1.msra.mxu0 0.0
    %183 = vmatprep.subr.mxu0 0.0
    %184 = vmatpush1.msra.mxu0 0.0
    %185 = vmatprep.subr.mxu0 0.0
    %186 = vmatpush1.msra.mxu0 0.0
    %187 = vmatprep.subr.mxu0 0.0
    %188 = vmatpush1.msra.mxu0 0.0
    %189 = vmatprep.subr.mxu0 0.0
    %190 = vmatpush1.msra.mxu0 0.0
    %191 = vmatprep.subr.mxu0 0.0
    %192 = vmatpush1.msra.mxu0 0.0
    %193 = vmatprep.subr.mxu0 0.0
    %194 = vmatpush1.msra.mxu0 %v84
    %195 = vmatprep.subr.mxu0 0.0
    %196 = vmatpush1.msra.mxu0 %v83
    %197 = vmatprep.subr.mxu0 0.0
    %198 = vmatpush1.msra.mxu0 %v82
    %199 = vmatprep.subr.mxu0 0.0
    %200 = vmatpush1.msra.mxu0 %v81
    %201 = vmatprep.subr.mxu0 0.0
    %202 = vmatpush2.msra.mxu0 0.0
    %203 = vmatprep.subr.mxu0 0.0
    %204 = vmatpush2.msra.mxu0 0.0
    %205 = vmatprep.subr.mxu0 0.0
    %206 = vmatpush2.msra.mxu0 0.0
    %207 = vmatprep.subr.mxu0 0.0
    %208 = vmatpush2.msra.mxu0 0.0
    %209 = vmatprep.subr.mxu0 0.0
    %210 = vmatpush2.msra.mxu0 0.0
    %211 = vmatprep.subr.mxu0 0.0
    %212 = vmatpush2.msra.mxu0 0.0
    %213 = vmatprep.subr.mxu0 0.0
    %214 = vmatpush2.msra.mxu0 0.0
    %215 = vmatprep.subr.mxu0 0.0
    %216 = vmatpush2.msra.mxu0 0.0
    %217 = vmatprep.subr.mxu0 0.0
    %218 = vmatpush2.msra.mxu0 0.0
    %219 = vmatprep.subr.mxu0 0.0
    %220 = vmatpush2.msra.mxu0 0.0
    %221 = vmatprep.subr.mxu0 0.0
    %222 = vmatpush2.msra.mxu0 0.0
    %223 = vmatprep.subr.mxu0 0.0
    %224 = vmatpush2.msra.mxu0 0.0
    %225 = vmatprep.subr.mxu0 0.0
    %226 = vmatpush2.msra.mxu0 0.0
    %227 = vmatprep.subr.mxu0 0.0
    %228 = vmatpush2.msra.mxu0 0.0
    %229 = vmatprep.subr.mxu0 0.0
    %230 = vmatpush2.msra.mxu0 0.0
    %231 = vmatprep.subr.mxu0 0.0
    %232 = vmatpush2.msra.mxu0 0.0
    %233 = vmatprep.mubr.f32.mxu0 0.0
    %234 = vmatmul.mubr.f32.gmra.mxu0 %v167
    %v235 = vpop.f32.mrf.mxu0
    %v236 = vadd.f32 %v162, %v235
    %v237 = vpop.f32.mrf.mxu0
    %238 = vdwg.mxu0
    %v240 = vlaneseq
    %v241 = vshrl.u32 %v240, 7
    %v242 = vsub.s32 0, %v241
    %v243 = vrot.slane %v87, %v242
    %v245 = vadd.f32 %v236, %v243
    %v246 = vxor.u32 %v245, 2147483648
    %v247 = vmul.f32 %v246, 1.442695
    %v248 = vpow.pop %v247
    %v249 = vadd.f32 %v248, 1.0
    %v250 = vrcp.pop %v249
    %v251 = vmul.f32 1.0, %v250
    %v252 = vtanh.pop %v245
    %v253 = vmul.f32 %v89, %v251
    %255 = vrot.lane.b32.xlu0 %v251, 64
    %v256 = vpop.permute.xlu0 %255
    %v258 = vmul.f32 %v252, %v256
    %260 = vrot.lane.b32.xlu0 %v258, 32
    %v261 = vpop.permute.xlu0 %260
    %v263 = vadd.f32 %v253, %v261
    %v264 = vtanh.pop %v263
    %v265 = vmul.f32 %v264, %v256
    %v268 = vunpack.c.l.s4 1966171168
    %v269 = vunpack.c.0.s8 %v268
    %v270 = vlaneseq
    %v271 = vshrl.u32 %v270, 7
    %v272 = vsub.s32 %v269, %v271
    %v273 = vrot.slane %v265, %v272
    %v274 = vcombine.high %v273, %v273
    %v276 = vunpack.c.l.s4 1966171168
    %v277 = vunpack.c.0.s8 %v276
    %v278 = vlaneseq
    %v279 = vshrl.u32 %v278, 7
    %v280 = vsub.s32 %v277, %v279
    %v281 = vrot.slane %v273, %v280
    %v283 = vunpack.c.l.s4 1966171168
    %v284 = vunpack.c.0.s8 %v283
    %v285 = vlaneseq
    %v286 = vshrl.u32 %v285, 7
    %v287 = vsub.s32 %v284, %v286
    %v288 = vrot.slane %v274, %v287
    %vm291 = vcmask 253952
    %292 = vst.msk [vmem:[#allocation10] sm:$0x1] %vm291, %v281
    %293 = vst.msk [vmem:[#allocation10 + $0x8] sm:$0x1] %vm291, %v288
    %s294 = scalar_lea.vmem [#allocation2], 2
    %v295 = vld [vmem:[%s294] sm:$0x3]
    %v297 = vsel %vm91, %v295, 0
    %299 = vmatprep.subr.mxu0 0.0
    %300 = vmatpush1.msra.mxu0 0.0
    %301 = vmatprep.subr.mxu0 0.0
    %302 = vmatpush1.msra.mxu0 0.0
    %303 = vmatprep.subr.mxu0 0.0
    %304 = vmatpush1.msra.mxu0 0.0
    %305 = vmatprep.subr.mxu0 0.0
    %306 = vmatpush1.msra.mxu0 0.0
    %307 = vmatprep.subr.mxu0 0.0
    %308 = vmatpush1.msra.mxu0 0.0
    %309 = vmatprep.subr.mxu0 0.0
    %310 = vmatpush1.msra.mxu0 0.0
    %311 = vmatprep.subr.mxu0 0.0
    %312 = vmatpush1.msra.mxu0 0.0
    %313 = vmatprep.subr.mxu0 0.0
    %314 = vmatpush1.msra.mxu0 0.0
    %315 = vmatprep.subr.mxu0 0.0
    %316 = vmatpush1.msra.mxu0 0.0
    %317 = vmatprep.subr.mxu0 0.0
    %318 = vmatpush1.msra.mxu0 0.0
    %319 = vmatprep.subr.mxu0 0.0
    %320 = vmatpush1.msra.mxu0 0.0
    %321 = vmatprep.subr.mxu0 0.0
    %322 = vmatpush1.msra.mxu0 0.0
    %323 = vmatprep.subr.mxu0 0.0
    %324 = vmatpush1.msra.mxu0 0.0
    %325 = vmatprep.subr.mxu0 0.0
    %326 = vmatpush1.msra.mxu0 0.0
    %327 = vmatprep.subr.mxu0 0.0
    %328 = vmatpush1.msra.mxu0 %v86
    %329 = vmatprep.subr.mxu0 0.0
    %330 = vmatpush1.msra.mxu0 %v85
    %331 = vmatprep.subr.mxu0 0.0
    %332 = vmatpush2.msra.mxu0 0.0
    %333 = vmatprep.subr.mxu0 0.0
    %334 = vmatpush2.msra.mxu0 0.0
    %335 = vmatprep.subr.mxu0 0.0
    %336 = vmatpush2.msra.mxu0 0.0
    %337 = vmatprep.subr.mxu0 0.0
    %338 = vmatpush2.msra.mxu0 0.0
    %339 = vmatprep.subr.mxu0 0.0
    %340 = vmatpush2.msra.mxu0 0.0
    %341 = vmatprep.subr.mxu0 0.0
    %342 = vmatpush2.msra.mxu0 0.0
    %343 = vmatprep.subr.mxu0 0.0
    %344 = vmatpush2.msra.mxu0 0.0
    %345 = vmatprep.subr.mxu0 0.0
    %346 = vmatpush2.msra.mxu0 0.0
    %347 = vmatprep.subr.mxu0 0.0
    %348 = vmatpush2.msra.mxu0 0.0
    %349 = vmatprep.subr.mxu0 0.0
    %350 = vmatpush2.msra.mxu0 0.0
    %351 = vmatprep.subr.mxu0 0.0
    %352 = vmatpush2.msra.mxu0 0.0
    %353 = vmatprep.subr.mxu0 0.0
    %354 = vmatpush2.msra.mxu0 0.0
    %355 = vmatprep.subr.mxu0 0.0
    %356 = vmatpush2.msra.mxu0 0.0
    %357 = vmatprep.subr.mxu0 0.0
    %358 = vmatpush2.msra.mxu0 0.0
    %359 = vmatprep.subr.mxu0 0.0
    %360 = vmatpush2.msra.mxu0 0.0
    %361 = vmatprep.subr.mxu0 0.0
    %362 = vmatpush2.msra.mxu0 0.0
    %363 = vmatprep.mubr.f32.mxu0 0.0
    %364 = vmatmul.mubr.f32.gmra.mxu0 %v297
    %v365 = vpop.f32.mrf.mxu0
    %v366 = vadd.f32 0.0, %v365
    %v367 = vpop.f32.mrf.mxu0
    %368 = vdwg.mxu0
    %v369 = vsel %vm165, %v265, 0
    %371 = vmatprep.subr.mxu0 0.0
    %372 = vmatpush1.msra.mxu0 0.0
    %373 = vmatprep.subr.mxu0 0.0
    %374 = vmatpush1.msra.mxu0 0.0
    %375 = vmatprep.subr.mxu0 0.0
    %376 = vmatpush1.msra.mxu0 0.0
    %377 = vmatprep.subr.mxu0 0.0
    %378 = vmatpush1.msra.mxu0 0.0
    %379 = vmatprep.subr.mxu0 0.0
    %380 = vmatpush1.msra.mxu0 0.0
    %381 = vmatprep.subr.mxu0 0.0
    %382 = vmatpush1.msra.mxu0 0.0
    %383 = vmatprep.subr.mxu0 0.0
    %384 = vmatpush1.msra.mxu0 0.0
    %385 = vmatprep.subr.mxu0 0.0
    %386 = vmatpush1.msra.mxu0 0.0
    %387 = vmatprep.subr.mxu0 0.0
    %388 = vmatpush1.msra.mxu0 0.0
    %389 = vmatprep.subr.mxu0 0.0
    %390 = vmatpush1.msra.mxu0 0.0
    %391 = vmatprep.subr.mxu0 0.0
    %392 = vmatpush1.msra.mxu0 0.0
    %393 = vmatprep.subr.mxu0 0.0
    %394 = vmatpush1.msra.mxu0 0.0
    %395 = vmatprep.subr.mxu0 0.0
    %396 = vmatpush1.msra.mxu0 %v84
    %397 = vmatprep.subr.mxu0 0.0
    %398 = vmatpush1.msra.mxu0 %v83
    %399 = vmatprep.subr.mxu0 0.0
    %400 = vmatpush1.msra.mxu0 %v82
    %401 = vmatprep.subr.mxu0 0.0
    %402 = vmatpush1.msra.mxu0 %v81
    %403 = vmatprep.subr.mxu0 0.0
    %404 = vmatpush2.msra.mxu0 0.0
    %405 = vmatprep.subr.mxu0 0.0
    %406 = vmatpush2.msra.mxu0 0.0
    %407 = vmatprep.subr.mxu0 0.0
    %408 = vmatpush2.msra.mxu0 0.0
    %409 = vmatprep.subr.mxu0 0.0
    %410 = vmatpush2.msra.mxu0 0.0
    %411 = vmatprep.subr.mxu0 0.0
    %412 = vmatpush2.msra.mxu0 0.0
    %413 = vmatprep.subr.mxu0 0.0
    %414 = vmatpush2.msra.mxu0 0.0
    %415 = vmatprep.subr.mxu0 0.0
    %416 = vmatpush2.msra.mxu0 0.0
    %417 = vmatprep.subr.mxu0 0.0
    %418 = vmatpush2.msra.mxu0 0.0
    %419 = vmatprep.subr.mxu0 0.0
    %420 = vmatpush2.msra.mxu0 0.0
    %421 = vmatprep.subr.mxu0 0.0
    %422 = vmatpush2.msra.mxu0 0.0
    %423 = vmatprep.subr.mxu0 0.0
    %424 = vmatpush2.msra.mxu0 0.0
    %425 = vmatprep.subr.mxu0 0.0
    %426 = vmatpush2.msra.mxu0 0.0
    %427 = vmatprep.subr.mxu0 0.0
    %428 = vmatpush2.msra.mxu0 0.0
    %429 = vmatprep.subr.mxu0 0.0
    %430 = vmatpush2.msra.mxu0 0.0
    %431 = vmatprep.subr.mxu0 0.0
    %432 = vmatpush2.msra.mxu0 0.0
    %433 = vmatprep.subr.mxu0 0.0
    %434 = vmatpush2.msra.mxu0 0.0
    %435 = vmatprep.mubr.f32.mxu0 0.0
    %436 = vmatmul.mubr.f32.gmra.mxu0 %v369
    %v437 = vpop.f32.mrf.mxu0
    %v438 = vadd.f32 %v366, %v437
    %v439 = vpop.f32.mrf.mxu0
    %440 = vdwg.mxu0
    %v441 = vadd.f32 %v438, %v243
    %v442 = vxor.u32 %v441, 2147483648
    %v443 = vmul.f32 %v442, 1.442695
    %v444 = vpow.pop %v443
    %v445 = vadd.f32 %v444, 1.0
    %v446 = vrcp.pop %v445
    %v447 = vmul.f32 1.0, %v446
    %v448 = vtanh.pop %v441
    %v449 = vmul.f32 %v263, %v447
    %451 = vrot.lane.b32.xlu0 %v447, 64
    %v452 = vpop.permute.xlu0 %451
    %v454 = vmul.f32 %v448, %v452
    %456 = vrot.lane.b32.xlu0 %v454, 32
    %v457 = vpop.permute.xlu0 %456
    %v459 = vadd.f32 %v449, %v457
    %v460 = vtanh.pop %v459
    %v461 = vmul.f32 %v460, %v452
    %v464 = vunpack.c.l.s4 1966171168
    %v465 = vunpack.c.0.s8 %v464
    %v466 = vlaneseq
    %v467 = vshrl.u32 %v466, 7
    %v468 = vsub.s32 %v465, %v467
    %v469 = vrot.slane %v461, %v468
    %v470 = vcombine.high %v469, %v469
    %v472 = vunpack.c.l.s4 1966171168
    %v473 = vunpack.c.0.s8 %v472
    %v474 = vlaneseq
    %v475 = vshrl.u32 %v474, 7
    %v476 = vsub.s32 %v473, %v475
    %v477 = vrot.slane %v469, %v476
    %v479 = vunpack.c.l.s4 1966171168
    %v480 = vunpack.c.0.s8 %v479
    %v481 = vlaneseq
    %v482 = vshrl.u32 %v481, 7
    %v483 = vsub.s32 %v480, %v482
    %v484 = vrot.slane %v470, %v483
    %487 = vst.msk [vmem:[#allocation10 + $0x1] sm:$0x1] %vm291, %v477
    %488 = vst.msk [vmem:[#allocation10 + $0x9] sm:$0x1] %vm291, %v484
    %s489 = scalar_lea.vmem [#allocation2], 4
    %v490 = vld [vmem:[%s489] sm:$0x3]
    %v492 = vsel %vm91, %v490, 0
    %494 = vmatprep.subr.mxu0 0.0
    %495 = vmatpush1.msra.mxu0 0.0
    %496 = vmatprep.subr.mxu0 0.0
    %497 = vmatpush1.msra.mxu0 0.0
    %498 = vmatprep.subr.mxu0 0.0
    %499 = vmatpush1.msra.mxu0 0.0
    %500 = vmatprep.subr.mxu0 0.0
    %501 = vmatpush1.msra.mxu0 0.0
    %502 = vmatprep.subr.mxu0 0.0
    %503 = vmatpush1.msra.mxu0 0.0
    %504 = vmatprep.subr.mxu0 0.0
    %505 = vmatpush1.msra.mxu0 0.0
    %506 = vmatprep.subr.mxu0 0.0
    %507 = vmatpush1.msra.mxu0 0.0
    %508 = vmatprep.subr.mxu0 0.0
    %509 = vmatpush1.msra.mxu0 0.0
    %510 = vmatprep.subr.mxu0 0.0
    %511 = vmatpush1.msra.mxu0 0.0
    %512 = vmatprep.subr.mxu0 0.0
    %513 = vmatpush1.msra.mxu0 0.0
    %514 = vmatprep.subr.mxu0 0.0
    %515 = vmatpush1.msra.mxu0 0.0
    %516 = vmatprep.subr.mxu0 0.0
    %517 = vmatpush1.msra.mxu0 0.0
    %518 = vmatprep.subr.mxu0 0.0
    %519 = vmatpush1.msra.mxu0 0.0
    %520 = vmatprep.subr.mxu0 0.0
    %521 = vmatpush1.msra.mxu0 0.0
    %522 = vmatprep.subr.mxu0 0.0
    %523 = vmatpush1.msra.mxu0 %v86
    %524 = vmatprep.subr.mxu0 0.0
    %525 = vmatpush1.msra.mxu0 %v85
    %526 = vmatprep.subr.mxu0 0.0
    %527 = vmatpush2.msra.mxu0 0.0
    %528 = vmatprep.subr.mxu0 0.0
    %529 = vmatpush2.msra.mxu0 0.0
    %530 = vmatprep.subr.mxu0 0.0
    %531 = vmatpush2.msra.mxu0 0.0
    %532 = vmatprep.subr.mxu0 0.0
    %533 = vmatpush2.msra.mxu0 0.0
    %534 = vmatprep.subr.mxu0 0.0
    %535 = vmatpush2.msra.mxu0 0.0
    %536 = vmatprep.subr.mxu0 0.0
    %537 = vmatpush2.msra.mxu0 0.0
    %538 = vmatprep.subr.mxu0 0.0
    %539 = vmatpush2.msra.mxu0 0.0
    %540 = vmatprep.subr.mxu0 0.0
    %541 = vmatpush2.msra.mxu0 0.0
    %542 = vmatprep.subr.mxu0 0.0
    %543 = vmatpush2.msra.mxu0 0.0
    %544 = vmatprep.subr.mxu0 0.0
    %545 = vmatpush2.msra.mxu0 0.0
    %546 = vmatprep.subr.mxu0 0.0
    %547 = vmatpush2.msra.mxu0 0.0
    %548 = vmatprep.subr.mxu0 0.0
    %549 = vmatpush2.msra.mxu0 0.0
    %550 = vmatprep.subr.mxu0 0.0
    %551 = vmatpush2.msra.mxu0 0.0
    %552 = vmatprep.subr.mxu0 0.0
    %553 = vmatpush2.msra.mxu0 0.0
    %554 = vmatprep.subr.mxu0 0.0
    %555 = vmatpush2.msra.mxu0 0.0
    %556 = vmatprep.subr.mxu0 0.0
    %557 = vmatpush2.msra.mxu0 0.0
    %558 = vmatprep.mubr.f32.mxu0 0.0
    %559 = vmatmul.mubr.f32.gmra.mxu0 %v492
    %v560 = vpop.f32.mrf.mxu0
    %v561 = vadd.f32 0.0, %v560
    %v562 = vpop.f32.mrf.mxu0
    %563 = vdwg.mxu0
    %v564 = vsel %vm165, %v461, 0
    %566 = vmatprep.subr.mxu0 0.0
    %567 = vmatpush1.msra.mxu0 0.0
    %568 = vmatprep.subr.mxu0 0.0
    %569 = vmatpush1.msra.mxu0 0.0
    %570 = vmatprep.subr.mxu0 0.0
    %571 = vmatpush1.msra.mxu0 0.0
    %572 = vmatprep.subr.mxu0 0.0
    %573 = vmatpush1.msra.mxu0 0.0
    %574 = vmatprep.subr.mxu0 0.0
    %575 = vmatpush1.msra.mxu0 0.0
    %576 = vmatprep.subr.mxu0 0.0
    %577 = vmatpush1.msra.mxu0 0.0
    %578 = vmatprep.subr.mxu0 0.0
    %579 = vmatpush1.msra.mxu0 0.0
    %580 = vmatprep.subr.mxu0 0.0
    %581 = vmatpush1.msra.mxu0 0.0
    %582 = vmatprep.subr.mxu0 0.0
    %583 = vmatpush1.msra.mxu0 0.0
    %584 = vmatprep.subr.mxu0 0.0
    %585 = vmatpush1.msra.mxu0 0.0
    %586 = vmatprep.subr.mxu0 0.0
    %587 = vmatpush1.msra.mxu0 0.0
    %588 = vmatprep.subr.mxu0 0.0
    %589 = vmatpush1.msra.mxu0 0.0
    %590 = vmatprep.subr.mxu0 0.0
    %591 = vmatpush1.msra.mxu0 %v84
    %592 = vmatprep.subr.mxu0 0.0
    %593 = vmatpush1.msra.mxu0 %v83
    %594 = vmatprep.subr.mxu0 0.0
    %595 = vmatpush1.msra.mxu0 %v82
    %596 = vmatprep.subr.mxu0 0.0
    %597 = vmatpush1.msra.mxu0 %v81
    %598 = vmatprep.subr.mxu0 0.0
    %599 = vmatpush2.msra.mxu0 0.0
    %600 = vmatprep.subr.mxu0 0.0
    %601 = vmatpush2.msra.mxu0 0.0
    %602 = vmatprep.subr.mxu0 0.0
    %603 = vmatpush2.msra.mxu0 0.0
    %604 = vmatprep.subr.mxu0 0.0
    %605 = vmatpush2.msra.mxu0 0.0
    %606 = vmatprep.subr.mxu0 0.0
    %607 = vmatpush2.msra.mxu0 0.0
    %608 = vmatprep.subr.mxu0 0.0
    %609 = vmatpush2.msra.mxu0 0.0
    %610 = vmatprep.subr.mxu0 0.0
    %611 = vmatpush2.msra.mxu0 0.0
    %612 = vmatprep.subr.mxu0 0.0
    %613 = vmatpush2.msra.mxu0 0.0
    %614 = vmatprep.subr.mxu0 0.0
    %615 = vmatpush2.msra.mxu0 0.0
    %616 = vmatprep.subr.mxu0 0.0
    %617 = vmatpush2.msra.mxu0 0.0
    %618 = vmatprep.subr.mxu0 0.0
    %619 = vmatpush2.msra.mxu0 0.0
    %620 = vmatprep.subr.mxu0 0.0
    %621 = vmatpush2.msra.mxu0 0.0
    %622 = vmatprep.subr.mxu0 0.0
    %623 = vmatpush2.msra.mxu0 0.0
    %624 = vmatprep.subr.mxu0 0.0
    %625 = vmatpush2.msra.mxu0 0.0
    %626 = vmatprep.subr.mxu0 0.0
    %627 = vmatpush2.msra.mxu0 0.0
    %628 = vmatprep.subr.mxu0 0.0
    %629 = vmatpush2.msra.mxu0 0.0
    %630 = vmatprep.mubr.f32.mxu0 0.0
    %631 = vmatmul.mubr.f32.gmra.mxu0 %v564
    %v632 = vpop.f32.mrf.mxu0
    %v633 = vadd.f32 %v561, %v632
    %v634 = vpop.f32.mrf.mxu0
    %635 = vdwg.mxu0
    %v636 = vadd.f32 %v633, %v243
    %v637 = vxor.u32 %v636, 2147483648
    %v638 = vmul.f32 %v637, 1.442695
    %v639 = vpow.pop %v638
    %v640 = vadd.f32 %v639, 1.0
    %v641 = vrcp.pop %v640
    %v642 = vmul.f32 1.0, %v641
    %v643 = vtanh.pop %v636
    %v644 = vmul.f32 %v459, %v642
    %646 = vrot.lane.b32.xlu0 %v642, 64
    %v647 = vpop.permute.xlu0 %646
    %v649 = vmul.f32 %v643, %v647
    %651 = vrot.lane.b32.xlu0 %v649, 32
    %v652 = vpop.permute.xlu0 %651
    %v654 = vadd.f32 %v644, %v652
    %v655 = vtanh.pop %v654
    %v656 = vmul.f32 %v655, %v647
    %v659 = vunpack.c.l.s4 1966171168
    %v660 = vunpack.c.0.s8 %v659
    %v661 = vlaneseq
    %v662 = vshrl.u32 %v661, 7
    %v663 = vsub.s32 %v660, %v662
    %v664 = vrot.slane %v656, %v663
    %v665 = vcombine.high %v664, %v664
    %v667 = vunpack.c.l.s4 1966171168
    %v668 = vunpack.c.0.s8 %v667
    %v669 = vlaneseq
    %v670 = vshrl.u32 %v669, 7
    %v671 = vsub.s32 %v668, %v670
    %v672 = vrot.slane %v664, %v671
    %v674 = vunpack.c.l.s4 1966171168
    %v675 = vunpack.c.0.s8 %v674
    %v676 = vlaneseq
    %v677 = vshrl.u32 %v676, 7
    %v678 = vsub.s32 %v675, %v677
    %v679 = vrot.slane %v665, %v678
    %682 = vst.msk [vmem:[#allocation10 + $0x2] sm:$0x1] %vm291, %v672
    %683 = vst.msk [vmem:[#allocation10 + $0xa] sm:$0x1] %vm291, %v679
    %s684 = scalar_lea.vmem [#allocation2], 6
    %v685 = vld [vmem:[%s684] sm:$0x3]
    %v687 = vsel %vm91, %v685, 0
    %689 = vmatprep.subr.mxu0 0.0
    %690 = vmatpush1.msra.mxu0 0.0
    %691 = vmatprep.subr.mxu0 0.0
    %692 = vmatpush1.msra.mxu0 0.0
    %693 = vmatprep.subr.mxu0 0.0
    %694 = vmatpush1.msra.mxu0 0.0
    %695 = vmatprep.subr.mxu0 0.0
    %696 = vmatpush1.msra.mxu0 0.0
    %697 = vmatprep.subr.mxu0 0.0
    %698 = vmatpush1.msra.mxu0 0.0
    %699 = vmatprep.subr.mxu0 0.0
    %700 = vmatpush1.msra.mxu0 0.0
    %701 = vmatprep.subr.mxu0 0.0
    %702 = vmatpush1.msra.mxu0 0.0
    %703 = vmatprep.subr.mxu0 0.0
    %704 = vmatpush1.msra.mxu0 0.0
    %705 = vmatprep.subr.mxu0 0.0
    %706 = vmatpush1.msra.mxu0 0.0
    %707 = vmatprep.subr.mxu0 0.0
    %708 = vmatpush1.msra.mxu0 0.0
    %709 = vmatprep.subr.mxu0 0.0
    %710 = vmatpush1.msra.mxu0 0.0
    %711 = vmatprep.subr.mxu0 0.0
    %712 = vmatpush1.msra.mxu0 0.0
    %713 = vmatprep.subr.mxu0 0.0
    %714 = vmatpush1.msra.mxu0 0.0
    %715 = vmatprep.subr.mxu0 0.0
    %716 = vmatpush1.msra.mxu0 0.0
    %717 = vmatprep.subr.mxu0 0.0
    %718 = vmatpush1.msra.mxu0 %v86
    %719 = vmatprep.subr.mxu0 0.0
    %720 = vmatpush1.msra.mxu0 %v85
    %721 = vmatprep.subr.mxu0 0.0
    %722 = vmatpush2.msra.mxu0 0.0
    %723 = vmatprep.subr.mxu0 0.0
    %724 = vmatpush2.msra.mxu0 0.0
    %725 = vmatprep.subr.mxu0 0.0
    %726 = vmatpush2.msra.mxu0 0.0
    %727 = vmatprep.subr.mxu0 0.0
    %728 = vmatpush2.msra.mxu0 0.0
    %729 = vmatprep.subr.mxu0 0.0
    %730 = vmatpush2.msra.mxu0 0.0
    %731 = vmatprep.subr.mxu0 0.0
    %732 = vmatpush2.msra.mxu0 0.0
    %733 = vmatprep.subr.mxu0 0.0
    %734 = vmatpush2.msra.mxu0 0.0
    %735 = vmatprep.subr.mxu0 0.0
    %736 = vmatpush2.msra.mxu0 0.0
    %737 = vmatprep.subr.mxu0 0.0
    %738 = vmatpush2.msra.mxu0 0.0
    %739 = vmatprep.subr.mxu0 0.0
    %740 = vmatpush2.msra.mxu0 0.0
    %741 = vmatprep.subr.mxu0 0.0
    %742 = vmatpush2.msra.mxu0 0.0
    %743 = vmatprep.subr.mxu0 0.0
    %744 = vmatpush2.msra.mxu0 0.0
    %745 = vmatprep.subr.mxu0 0.0
    %746 = vmatpush2.msra.mxu0 0.0
    %747 = vmatprep.subr.mxu0 0.0
    %748 = vmatpush2.msra.mxu0 0.0
    %749 = vmatprep.subr.mxu0 0.0
    %750 = vmatpush2.msra.mxu0 0.0
    %751 = vmatprep.subr.mxu0 0.0
    %752 = vmatpush2.msra.mxu0 0.0
    %753 = vmatprep.mubr.f32.mxu0 0.0
    %754 = vmatmul.mubr.f32.gmra.mxu0 %v687
    %v755 = vpop.f32.mrf.mxu0
    %v756 = vadd.f32 0.0, %v755
    %v757 = vpop.f32.mrf.mxu0
    %758 = vdwg.mxu0
    %v759 = vsel %vm165, %v656, 0
    %761 = vmatprep.subr.mxu0 0.0
    %762 = vmatpush1.msra.mxu0 0.0
    %763 = vmatprep.subr.mxu0 0.0
    %764 = vmatpush1.msra.mxu0 0.0
    %765 = vmatprep.subr.mxu0 0.0
    %766 = vmatpush1.msra.mxu0 0.0
    %767 = vmatprep.subr.mxu0 0.0
    %768 = vmatpush1.msra.mxu0 0.0
    %769 = vmatprep.subr.mxu0 0.0
    %770 = vmatpush1.msra.mxu0 0.0
    %771 = vmatprep.subr.mxu0 0.0
    %772 = vmatpush1.msra.mxu0 0.0
    %773 = vmatprep.subr.mxu0 0.0
    %774 = vmatpush1.msra.mxu0 0.0
    %775 = vmatprep.subr.mxu0 0.0
    %776 = vmatpush1.msra.mxu0 0.0
    %777 = vmatprep.subr.mxu0 0.0
    %778 = vmatpush1.msra.mxu0 0.0
    %779 = vmatprep.subr.mxu0 0.0
    %780 = vmatpush1.msra.mxu0 0.0
    %781 = vmatprep.subr.mxu0 0.0
    %782 = vmatpush1.msra.mxu0 0.0
    %783 = vmatprep.subr.mxu0 0.0
    %784 = vmatpush1.msra.mxu0 0.0
    %785 = vmatprep.subr.mxu0 0.0
    %786 = vmatpush1.msra.mxu0 %v84
    %787 = vmatprep.subr.mxu0 0.0
    %788 = vmatpush1.msra.mxu0 %v83
    %789 = vmatprep.subr.mxu0 0.0
    %790 = vmatpush1.msra.mxu0 %v82
    %791 = vmatprep.subr.mxu0 0.0
    %792 = vmatpush1.msra.mxu0 %v81
    %793 = vmatprep.subr.mxu0 0.0
    %794 = vmatpush2.msra.mxu0 0.0
    %795 = vmatprep.subr.mxu0 0.0
    %796 = vmatpush2.msra.mxu0 0.0
    %797 = vmatprep.subr.mxu0 0.0
    %798 = vmatpush2.msra.mxu0 0.0
    %799 = vmatprep.subr.mxu0 0.0
    %800 = vmatpush2.msra.mxu0 0.0
    %801 = vmatprep.subr.mxu0 0.0
    %802 = vmatpush2.msra.mxu0 0.0
    %803 = vmatprep.subr.mxu0 0.0
    %804 = vmatpush2.msra.mxu0 0.0
    %805 = vmatprep.subr.mxu0 0.0
    %806 = vmatpush2.msra.mxu0 0.0
    %807 = vmatprep.subr.mxu0 0.0
    %808 = vmatpush2.msra.mxu0 0.0
    %809 = vmatprep.subr.mxu0 0.0
    %810 = vmatpush2.msra.mxu0 0.0
    %811 = vmatprep.subr.mxu0 0.0
    %812 = vmatpush2.msra.mxu0 0.0
    %813 = vmatprep.subr.mxu0 0.0
    %814 = vmatpush2.msra.mxu0 0.0
    %815 = vmatprep.subr.mxu0 0.0
    %816 = vmatpush2.msra.mxu0 0.0
    %817 = vmatprep.subr.mxu0 0.0
    %818 = vmatpush2.msra.mxu0 0.0
    %819 = vmatprep.subr.mxu0 0.0
    %820 = vmatpush2.msra.mxu0 0.0
    %821 = vmatprep.subr.mxu0 0.0
    %822 = vmatpush2.msra.mxu0 0.0
    %823 = vmatprep.subr.mxu0 0.0
    %824 = vmatpush2.msra.mxu0 0.0
    %825 = vmatprep.mubr.f32.mxu0 0.0
    %826 = vmatmul.mubr.f32.gmra.mxu0 %v759
    %v827 = vpop.f32.mrf.mxu0
    %v828 = vadd.f32 %v756, %v827
    %v829 = vpop.f32.mrf.mxu0
    %830 = vdwg.mxu0
    %v831 = vadd.f32 %v828, %v243
    %v832 = vxor.u32 %v831, 2147483648
    %v833 = vmul.f32 %v832, 1.442695
    %v834 = vpow.pop %v833
    %v835 = vadd.f32 %v834, 1.0
    %v836 = vrcp.pop %v835
    %v837 = vmul.f32 1.0, %v836
    %v838 = vtanh.pop %v831
    %v839 = vmul.f32 %v654, %v837
    %841 = vrot.lane.b32.xlu0 %v837, 64
    %v842 = vpop.permute.xlu0 %841
    %v844 = vmul.f32 %v838, %v842
    %846 = vrot.lane.b32.xlu0 %v844, 32
    %v847 = vpop.permute.xlu0 %846
    %v849 = vadd.f32 %v839, %v847
    %v850 = vtanh.pop %v849
    %v851 = vmul.f32 %v850, %v842
    %v854 = vunpack.c.l.s4 1966171168
    %v855 = vunpack.c.0.s8 %v854
    %v856 = vlaneseq
    %v857 = vshrl.u32 %v856, 7
    %v858 = vsub.s32 %v855, %v857
    %v859 = vrot.slane %v851, %v858
    %v860 = vcombine.high %v859, %v859
    %v862 = vunpack.c.l.s4 1966171168
    %v863 = vunpack.c.0.s8 %v862
    %v864 = vlaneseq
    %v865 = vshrl.u32 %v864, 7
    %v866 = vsub.s32 %v863, %v865
    %v867 = vrot.slane %v859, %v866
    %v869 = vunpack.c.l.s4 1966171168
    %v870 = vunpack.c.0.s8 %v869
    %v871 = vlaneseq
    %v872 = vshrl.u32 %v871, 7
    %v873 = vsub.s32 %v870, %v872
    %v874 = vrot.slane %v860, %v873
    %877 = vst.msk [vmem:[#allocation10 + $0x3] sm:$0x1] %vm291, %v867
    %878 = vst.msk [vmem:[#allocation10 + $0xb] sm:$0x1] %vm291, %v874
    %s879 = scalar_lea.vmem [#allocation2], 8
    %v880 = vld [vmem:[%s879] sm:$0x3]
    %v882 = vsel %vm91, %v880, 0
    %884 = vmatprep.subr.mxu0 0.0
    %885 = vmatpush1.msra.mxu0 0.0
    %886 = vmatprep.subr.mxu0 0.0
    %887 = vmatpush1.msra.mxu0 0.0
    %888 = vmatprep.subr.mxu0 0.0
    %889 = vmatpush1.msra.mxu0 0.0
    %890 = vmatprep.subr.mxu0 0.0
    %891 = vmatpush1.msra.mxu0 0.0
    %892 = vmatprep.subr.mxu0 0.0
    %893 = vmatpush1.msra.mxu0 0.0
    %894 = vmatprep.subr.mxu0 0.0
    %895 = vmatpush1.msra.mxu0 0.0
    %896 = vmatprep.subr.mxu0 0.0
    %897 = vmatpush1.msra.mxu0 0.0
    %898 = vmatprep.subr.mxu0 0.0
    %899 = vmatpush1.msra.mxu0 0.0
    %900 = vmatprep.subr.mxu0 0.0
    %901 = vmatpush1.msra.mxu0 0.0
    %902 = vmatprep.subr.mxu0 0.0
    %903 = vmatpush1.msra.mxu0 0.0
    %904 = vmatprep.subr.mxu0 0.0
    %905 = vmatpush1.msra.mxu0 0.0
    %906 = vmatprep.subr.mxu0 0.0
    %907 = vmatpush1.msra.mxu0 0.0
    %908 = vmatprep.subr.mxu0 0.0
    %909 = vmatpush1.msra.mxu0 0.0
    %910 = vmatprep.subr.mxu0 0.0
    %911 = vmatpush1.msra.mxu0 0.0
    %912 = vmatprep.subr.mxu0 0.0
    %913 = vmatpush1.msra.mxu0 %v86
    %914 = vmatprep.subr.mxu0 0.0
    %915 = vmatpush1.msra.mxu0 %v85
    %916 = vmatprep.subr.mxu0 0.0
    %917 = vmatpush2.msra.mxu0 0.0
    %918 = vmatprep.subr.mxu0 0.0
    %919 = vmatpush2.msra.mxu0 0.0
    %920 = vmatprep.subr.mxu0 0.0
    %921 = vmatpush2.msra.mxu0 0.0
    %922 = vmatprep.subr.mxu0 0.0
    %923 = vmatpush2.msra.mxu0 0.0
    %924 = vmatprep.subr.mxu0 0.0
    %925 = vmatpush2.msra.mxu0 0.0
    %926 = vmatprep.subr.mxu0 0.0
    %927 = vmatpush2.msra.mxu0 0.0
    %928 = vmatprep.subr.mxu0 0.0
    %929 = vmatpush2.msra.mxu0 0.0
    %930 = vmatprep.subr.mxu0 0.0
    %931 = vmatpush2.msra.mxu0 0.0
    %932 = vmatprep.subr.mxu0 0.0
    %933 = vmatpush2.msra.mxu0 0.0
    %934 = vmatprep.subr.mxu0 0.0
    %935 = vmatpush2.msra.mxu0 0.0
    %936 = vmatprep.subr.mxu0 0.0
    %937 = vmatpush2.msra.mxu0 0.0
    %938 = vmatprep.subr.mxu0 0.0
    %939 = vmatpush2.msra.mxu0 0.0
    %940 = vmatprep.subr.mxu0 0.0
    %941 = vmatpush2.msra.mxu0 0.0
    %942 = vmatprep.subr.mxu0 0.0
    %943 = vmatpush2.msra.mxu0 0.0
    %944 = vmatprep.subr.mxu0 0.0
    %945 = vmatpush2.msra.mxu0 0.0
    %946 = vmatprep.subr.mxu0 0.0
    %947 = vmatpush2.msra.mxu0 0.0
    %948 = vmatprep.mubr.f32.mxu0 0.0
    %949 = vmatmul.mubr.f32.gmra.mxu0 %v882
    %v950 = vpop.f32.mrf.mxu0
    %v951 = vadd.f32 0.0, %v950
    %v952 = vpop.f32.mrf.mxu0
    %953 = vdwg.mxu0
    %v954 = vsel %vm165, %v851, 0
    %956 = vmatprep.subr.mxu0 0.0
    %957 = vmatpush1.msra.mxu0 0.0
    %958 = vmatprep.subr.mxu0 0.0
    %959 = vmatpush1.msra.mxu0 0.0
    %960 = vmatprep.subr.mxu0 0.0
    %961 = vmatpush1.msra.mxu0 0.0
    %962 = vmatprep.subr.mxu0 0.0
    %963 = vmatpush1.msra.mxu0 0.0
    %964 = vmatprep.subr.mxu0 0.0
    %965 = vmatpush1.msra.mxu0 0.0
    %966 = vmatprep.subr.mxu0 0.0
    %967 = vmatpush1.msra.mxu0 0.0
    %968 = vmatprep.subr.mxu0 0.0
    %969 = vmatpush1.msra.mxu0 0.0
    %970 = vmatprep.subr.mxu0 0.0
    %971 = vmatpush1.msra.mxu0 0.0
    %972 = vmatprep.subr.mxu0 0.0
    %973 = vmatpush1.msra.mxu0 0.0
    %974 = vmatprep.subr.mxu0 0.0
    %975 = vmatpush1.msra.mxu0 0.0
    %976 = vmatprep.subr.mxu0 0.0
    %977 = vmatpush1.msra.mxu0 0.0
    %978 = vmatprep.subr.mxu0 0.0
    %979 = vmatpush1.msra.mxu0 0.0
    %980 = vmatprep.subr.mxu0 0.0
    %981 = vmatpush1.msra.mxu0 %v84
    %982 = vmatprep.subr.mxu0 0.0
    %983 = vmatpush1.msra.mxu0 %v83
    %984 = vmatprep.subr.mxu0 0.0
    %985 = vmatpush1.msra.mxu0 %v82
    %986 = vmatprep.subr.mxu0 0.0
    %987 = vmatpush1.msra.mxu0 %v81
    %988 = vmatprep.subr.mxu0 0.0
    %989 = vmatpush2.msra.mxu0 0.0
    %990 = vmatprep.subr.mxu0 0.0
    %991 = vmatpush2.msra.mxu0 0.0
    %992 = vmatprep.subr.mxu0 0.0
    %993 = vmatpush2.msra.mxu0 0.0
    %994 = vmatprep.subr.mxu0 0.0
    %995 = vmatpush2.msra.mxu0 0.0
    %996 = vmatprep.subr.mxu0 0.0
    %997 = vmatpush2.msra.mxu0 0.0
    %998 = vmatprep.subr.mxu0 0.0
    %999 = vmatpush2.msra.mxu0 0.0
    %1000 = vmatprep.subr.mxu0 0.0
    %1001 = vmatpush2.msra.mxu0 0.0
    %1002 = vmatprep.subr.mxu0 0.0
    %1003 = vmatpush2.msra.mxu0 0.0
    %1004 = vmatprep.subr.mxu0 0.0
    %1005 = vmatpush2.msra.mxu0 0.0
    %1006 = vmatprep.subr.mxu0 0.0
    %1007 = vmatpush2.msra.mxu0 0.0
    %1008 = vmatprep.subr.mxu0 0.0
    %1009 = vmatpush2.msra.mxu0 0.0
    %1010 = vmatprep.subr.mxu0 0.0
    %1011 = vmatpush2.msra.mxu0 0.0
    %1012 = vmatprep.subr.mxu0 0.0
    %1013 = vmatpush2.msra.mxu0 0.0
    %1014 = vmatprep.subr.mxu0 0.0
    %1015 = vmatpush2.msra.mxu0 0.0
    %1016 = vmatprep.subr.mxu0 0.0
    %1017 = vmatpush2.msra.mxu0 0.0
    %1018 = vmatprep.subr.mxu0 0.0
    %1019 = vmatpush2.msra.mxu0 0.0
    %1020 = vmatprep.mubr.f32.mxu0 0.0
    %1021 = vmatmul.mubr.f32.gmra.mxu0 %v954
    %v1022 = vpop.f32.mrf.mxu0
    %v1023 = vadd.f32 %v951, %v1022
    %v1024 = vpop.f32.mrf.mxu0
    %1025 = vdwg.mxu0
    %v1026 = vadd.f32 %v1023, %v243
    %v1027 = vxor.u32 %v1026, 2147483648
    %v1028 = vmul.f32 %v1027, 1.442695
    %v1029 = vpow.pop %v1028
    %v1030 = vadd.f32 %v1029, 1.0
    %v1031 = vrcp.pop %v1030
    %v1032 = vmul.f32 1.0, %v1031
    %v1033 = vtanh.pop %v1026
    %v1034 = vmul.f32 %v849, %v1032
    %1036 = vrot.lane.b32.xlu0 %v1032, 64
    %v1037 = vpop.permute.xlu0 %1036
    %v1039 = vmul.f32 %v1033, %v1037
    %1041 = vrot.lane.b32.xlu0 %v1039, 32
    %v1042 = vpop.permute.xlu0 %1041
    %v1044 = vadd.f32 %v1034, %v1042
    %v1045 = vtanh.pop %v1044
    %v1046 = vmul.f32 %v1045, %v1037
    %v1049 = vunpack.c.l.s4 1966171168
    %v1050 = vunpack.c.0.s8 %v1049
    %v1051 = vlaneseq
    %v1052 = vshrl.u32 %v1051, 7
    %v1053 = vsub.s32 %v1050, %v1052
    %v1054 = vrot.slane %v1046, %v1053
    %v1055 = vcombine.high %v1054, %v1054
    %v1057 = vunpack.c.l.s4 1966171168
    %v1058 = vunpack.c.0.s8 %v1057
    %v1059 = vlaneseq
    %v1060 = vshrl.u32 %v1059, 7
    %v1061 = vsub.s32 %v1058, %v1060
    %v1062 = vrot.slane %v1054, %v1061
    %v1064 = vunpack.c.l.s4 1966171168
    %v1065 = vunpack.c.0.s8 %v1064
    %v1066 = vlaneseq
    %v1067 = vshrl.u32 %v1066, 7
    %v1068 = vsub.s32 %v1065, %v1067
    %v1069 = vrot.slane %v1055, %v1068
    %1072 = vst.msk [vmem:[#allocation10 + $0x4] sm:$0x1] %vm291, %v1062
    %1073 = vst.msk [vmem:[#allocation10 + $0xc] sm:$0x1] %vm291, %v1069
    %s1074 = scalar_lea.vmem [#allocation2], 10
    %v1075 = vld [vmem:[%s1074] sm:$0x3]
    %v1077 = vsel %vm91, %v1075, 0
    %1079 = vmatprep.subr.mxu0 0.0
    %1080 = vmatpush1.msra.mxu0 0.0
    %1081 = vmatprep.subr.mxu0 0.0
    %1082 = vmatpush1.msra.mxu0 0.0
    %1083 = vmatprep.subr.mxu0 0.0
    %1084 = vmatpush1.msra.mxu0 0.0
    %1085 = vmatprep.subr.mxu0 0.0
    %1086 = vmatpush1.msra.mxu0 0.0
    %1087 = vmatprep.subr.mxu0 0.0
    %1088 = vmatpush1.msra.mxu0 0.0
    %1089 = vmatprep.subr.mxu0 0.0
    %1090 = vmatpush1.msra.mxu0 0.0
    %1091 = vmatprep.subr.mxu0 0.0
    %1092 = vmatpush1.msra.mxu0 0.0
    %1093 = vmatprep.subr.mxu0 0.0
    %1094 = vmatpush1.msra.mxu0 0.0
    %1095 = vmatprep.subr.mxu0 0.0
    %1096 = vmatpush1.msra.mxu0 0.0
    %1097 = vmatprep.subr.mxu0 0.0
    %1098 = vmatpush1.msra.mxu0 0.0
    %1099 = vmatprep.subr.mxu0 0.0
    %1100 = vmatpush1.msra.mxu0 0.0
    %1101 = vmatprep.subr.mxu0 0.0
    %1102 = vmatpush1.msra.mxu0 0.0
    %1103 = vmatprep.subr.mxu0 0.0
    %1104 = vmatpush1.msra.mxu0 0.0
    %1105 = vmatprep.subr.mxu0 0.0
    %1106 = vmatpush1.msra.mxu0 0.0
    %1107 = vmatprep.subr.mxu0 0.0
    %1108 = vmatpush1.msra.mxu0 %v86
    %1109 = vmatprep.subr.mxu0 0.0
    %1110 = vmatpush1.msra.mxu0 %v85
    %1111 = vmatprep.subr.mxu0 0.0
    %1112 = vmatpush2.msra.mxu0 0.0
    %1113 = vmatprep.subr.mxu0 0.0
    %1114 = vmatpush2.msra.mxu0 0.0
    %1115 = vmatprep.subr.mxu0 0.0
    %1116 = vmatpush2.msra.mxu0 0.0
    %1117 = vmatprep.subr.mxu0 0.0
    %1118 = vmatpush2.msra.mxu0 0.0
    %1119 = vmatprep.subr.mxu0 0.0
    %1120 = vmatpush2.msra.mxu0 0.0
    %1121 = vmatprep.subr.mxu0 0.0
    %1122 = vmatpush2.msra.mxu0 0.0
    %1123 = vmatprep.subr.mxu0 0.0
    %1124 = vmatpush2.msra.mxu0 0.0
    %1125 = vmatprep.subr.mxu0 0.0
    %1126 = vmatpush2.msra.mxu0 0.0
    %1127 = vmatprep.subr.mxu0 0.0
    %1128 = vmatpush2.msra.mxu0 0.0
    %1129 = vmatprep.subr.mxu0 0.0
    %1130 = vmatpush2.msra.mxu0 0.0
    %1131 = vmatprep.subr.mxu0 0.0
    %1132 = vmatpush2.msra.mxu0 0.0
    %1133 = vmatprep.subr.mxu0 0.0
    %1134 = vmatpush2.msra.mxu0 0.0
    %1135 = vmatprep.subr.mxu0 0.0
    %1136 = vmatpush2.msra.mxu0 0.0
    %1137 = vmatprep.subr.mxu0 0.0
    %1138 = vmatpush2.msra.mxu0 0.0
    %1139 = vmatprep.subr.mxu0 0.0
    %1140 = vmatpush2.msra.mxu0 0.0
    %1141 = vmatprep.subr.mxu0 0.0
    %1142 = vmatpush2.msra.mxu0 0.0
    %1143 = vmatprep.mubr.f32.mxu0 0.0
    %1144 = vmatmul.mubr.f32.gmra.mxu0 %v1077
    %v1145 = vpop.f32.mrf.mxu0
    %v1146 = vadd.f32 0.0, %v1145
    %v1147 = vpop.f32.mrf.mxu0
    %1148 = vdwg.mxu0
    %v1149 = vsel %vm165, %v1046, 0
    %1151 = vmatprep.subr.mxu0 0.0
    %1152 = vmatpush1.msra.mxu0 0.0
    %1153 = vmatprep.subr.mxu0 0.0
    %1154 = vmatpush1.msra.mxu0 0.0
    %1155 = vmatprep.subr.mxu0 0.0
    %1156 = vmatpush1.msra.mxu0 0.0
    %1157 = vmatprep.subr.mxu0 0.0
    %1158 = vmatpush1.msra.mxu0 0.0
    %1159 = vmatprep.subr.mxu0 0.0
    %1160 = vmatpush1.msra.mxu0 0.0
    %1161 = vmatprep.subr.mxu0 0.0
    %1162 = vmatpush1.msra.mxu0 0.0
    %1163 = vmatprep.subr.mxu0 0.0
    %1164 = vmatpush1.msra.mxu0 0.0
    %1165 = vmatprep.subr.mxu0 0.0
    %1166 = vmatpush1.msra.mxu0 0.0
    %1167 = vmatprep.subr.mxu0 0.0
    %1168 = vmatpush1.msra.mxu0 0.0
    %1169 = vmatprep.subr.mxu0 0.0
    %1170 = vmatpush1.msra.mxu0 0.0
    %1171 = vmatprep.subr.mxu0 0.0
    %1172 = vmatpush1.msra.mxu0 0.0
    %1173 = vmatprep.subr.mxu0 0.0
    %1174 = vmatpush1.msra.mxu0 0.0
    %1175 = vmatprep.subr.mxu0 0.0
    %1176 = vmatpush1.msra.mxu0 %v84
    %1177 = vmatprep.subr.mxu0 0.0
    %1178 = vmatpush1.msra.mxu0 %v83
    %1179 = vmatprep.subr.mxu0 0.0
    %1180 = vmatpush1.msra.mxu0 %v82
    %1181 = vmatprep.subr.mxu0 0.0
    %1182 = vmatpush1.msra.mxu0 %v81
    %1183 = vmatprep.subr.mxu0 0.0
    %1184 = vmatpush2.msra.mxu0 0.0
    %1185 = vmatprep.subr.mxu0 0.0
    %1186 = vmatpush2.msra.mxu0 0.0
    %1187 = vmatprep.subr.mxu0 0.0
    %1188 = vmatpush2.msra.mxu0 0.0
    %1189 = vmatprep.subr.mxu0 0.0
    %1190 = vmatpush2.msra.mxu0 0.0
    %1191 = vmatprep.subr.mxu0 0.0
    %1192 = vmatpush2.msra.mxu0 0.0
    %1193 = vmatprep.subr.mxu0 0.0
    %1194 = vmatpush2.msra.mxu0 0.0
    %1195 = vmatprep.subr.mxu0 0.0
    %1196 = vmatpush2.msra.mxu0 0.0
    %1197 = vmatprep.subr.mxu0 0.0
    %1198 = vmatpush2.msra.mxu0 0.0
    %1199 = vmatprep.subr.mxu0 0.0
    %1200 = vmatpush2.msra.mxu0 0.0
    %1201 = vmatprep.subr.mxu0 0.0
    %1202 = vmatpush2.msra.mxu0 0.0
    %1203 = vmatprep.subr.mxu0 0.0
    %1204 = vmatpush2.msra.mxu0 0.0
    %1205 = vmatprep.subr.mxu0 0.0
    %1206 = vmatpush2.msra.mxu0 0.0
    %1207 = vmatprep.subr.mxu0 0.0
    %1208 = vmatpush2.msra.mxu0 0.0
    %1209 = vmatprep.subr.mxu0 0.0
    %1210 = vmatpush2.msra.mxu0 0.0
    %1211 = vmatprep.subr.mxu0 0.0
    %1212 = vmatpush2.msra.mxu0 0.0
    %1213 = vmatprep.subr.mxu0 0.0
    %1214 = vmatpush2.msra.mxu0 0.0
    %1215 = vmatprep.mubr.f32.mxu0 0.0
    %1216 = vmatmul.mubr.f32.gmra.mxu0 %v1149
    %v1217 = vpop.f32.mrf.mxu0
    %v1218 = vadd.f32 %v1146, %v1217
    %v1219 = vpop.f32.mrf.mxu0
    %1220 = vdwg.mxu0
    %v1221 = vadd.f32 %v1218, %v243
    %v1222 = vxor.u32 %v1221, 2147483648
    %v1223 = vmul.f32 %v1222, 1.442695
    %v1224 = vpow.pop %v1223
    %v1225 = vadd.f32 %v1224, 1.0
    %v1226 = vrcp.pop %v1225
    %v1227 = vmul.f32 1.0, %v1226
    %v1228 = vtanh.pop %v1221
    %v1229 = vmul.f32 %v1044, %v1227
    %1231 = vrot.lane.b32.xlu0 %v1227, 64
    %v1232 = vpop.permute.xlu0 %1231
    %v1234 = vmul.f32 %v1228, %v1232
    %1236 = vrot.lane.b32.xlu0 %v1234, 32
    %v1237 = vpop.permute.xlu0 %1236
    %v1239 = vadd.f32 %v1229, %v1237
    %v1240 = vtanh.pop %v1239
    %v1241 = vmul.f32 %v1240, %v1232
    %v1244 = vunpack.c.l.s4 1966171168
    %v1245 = vunpack.c.0.s8 %v1244
    %v1246 = vlaneseq
    %v1247 = vshrl.u32 %v1246, 7
    %v1248 = vsub.s32 %v1245, %v1247
    %v1249 = vrot.slane %v1241, %v1248
    %v1250 = vcombine.high %v1249, %v1249
    %v1252 = vunpack.c.l.s4 1966171168
    %v1253 = vunpack.c.0.s8 %v1252
    %v1254 = vlaneseq
    %v1255 = vshrl.u32 %v1254, 7
    %v1256 = vsub.s32 %v1253, %v1255
    %v1257 = vrot.slane %v1249, %v1256
    %v1259 = vunpack.c.l.s4 1966171168
    %v1260 = vunpack.c.0.s8 %v1259
    %v1261 = vlaneseq
    %v1262 = vshrl.u32 %v1261, 7
    %v1263 = vsub.s32 %v1260, %v1262
    %v1264 = vrot.slane %v1250, %v1263
    %1267 = vst.msk [vmem:[#allocation10 + $0x5] sm:$0x1] %vm291, %v1257
    %1268 = vst.msk [vmem:[#allocation10 + $0xd] sm:$0x1] %vm291, %v1264
    %s1269 = scalar_lea.vmem [#allocation2], 12
    %v1270 = vld [vmem:[%s1269] sm:$0x3]
    %v1272 = vsel %vm91, %v1270, 0
    %1274 = vmatprep.subr.mxu0 0.0
    %1275 = vmatpush1.msra.mxu0 0.0
    %1276 = vmatprep.subr.mxu0 0.0
    %1277 = vmatpush1.msra.mxu0 0.0
    %1278 = vmatprep.subr.mxu0 0.0
    %1279 = vmatpush1.msra.mxu0 0.0
    %1280 = vmatprep.subr.mxu0 0.0
    %1281 = vmatpush1.msra.mxu0 0.0
    %1282 = vmatprep.subr.mxu0 0.0
    %1283 = vmatpush1.msra.mxu0 0.0
    %1284 = vmatprep.subr.mxu0 0.0
    %1285 = vmatpush1.msra.mxu0 0.0
    %1286 = vmatprep.subr.mxu0 0.0
    %1287 = vmatpush1.msra.mxu0 0.0
    %1288 = vmatprep.subr.mxu0 0.0
    %1289 = vmatpush1.msra.mxu0 0.0
    %1290 = vmatprep.subr.mxu0 0.0
    %1291 = vmatpush1.msra.mxu0 0.0
    %1292 = vmatprep.subr.mxu0 0.0
    %1293 = vmatpush1.msra.mxu0 0.0
    %1294 = vmatprep.subr.mxu0 0.0
    %1295 = vmatpush1.msra.mxu0 0.0
    %1296 = vmatprep.subr.mxu0 0.0
    %1297 = vmatpush1.msra.mxu0 0.0
    %1298 = vmatprep.subr.mxu0 0.0
    %1299 = vmatpush1.msra.mxu0 0.0
    %1300 = vmatprep.subr.mxu0 0.0
    %1301 = vmatpush1.msra.mxu0 0.0
    %1302 = vmatprep.subr.mxu0 0.0
    %1303 = vmatpush1.msra.mxu0 %v86
    %1304 = vmatprep.subr.mxu0 0.0
    %1305 = vmatpush1.msra.mxu0 %v85
    %1306 = vmatprep.subr.mxu0 0.0
    %1307 = vmatpush2.msra.mxu0 0.0
    %1308 = vmatprep.subr.mxu0 0.0
    %1309 = vmatpush2.msra.mxu0 0.0
    %1310 = vmatprep.subr.mxu0 0.0
    %1311 = vmatpush2.msra.mxu0 0.0
    %1312 = vmatprep.subr.mxu0 0.0
    %1313 = vmatpush2.msra.mxu0 0.0
    %1314 = vmatprep.subr.mxu0 0.0
    %1315 = vmatpush2.msra.mxu0 0.0
    %1316 = vmatprep.subr.mxu0 0.0
    %1317 = vmatpush2.msra.mxu0 0.0
    %1318 = vmatprep.subr.mxu0 0.0
    %1319 = vmatpush2.msra.mxu0 0.0
    %1320 = vmatprep.subr.mxu0 0.0
    %1321 = vmatpush2.msra.mxu0 0.0
    %1322 = vmatprep.subr.mxu0 0.0
    %1323 = vmatpush2.msra.mxu0 0.0
    %1324 = vmatprep.subr.mxu0 0.0
    %1325 = vmatpush2.msra.mxu0 0.0
    %1326 = vmatprep.subr.mxu0 0.0
    %1327 = vmatpush2.msra.mxu0 0.0
    %1328 = vmatprep.subr.mxu0 0.0
    %1329 = vmatpush2.msra.mxu0 0.0
    %1330 = vmatprep.subr.mxu0 0.0
    %1331 = vmatpush2.msra.mxu0 0.0
    %1332 = vmatprep.subr.mxu0 0.0
    %1333 = vmatpush2.msra.mxu0 0.0
    %1334 = vmatprep.subr.mxu0 0.0
    %1335 = vmatpush2.msra.mxu0 0.0
    %1336 = vmatprep.subr.mxu0 0.0
    %1337 = vmatpush2.msra.mxu0 0.0
    %1338 = vmatprep.mubr.f32.mxu0 0.0
    %1339 = vmatmul.mubr.f32.gmra.mxu0 %v1272
    %v1340 = vpop.f32.mrf.mxu0
    %v1341 = vadd.f32 0.0, %v1340
    %v1342 = vpop.f32.mrf.mxu0
    %1343 = vdwg.mxu0
    %v1344 = vsel %vm165, %v1241, 0
    %1346 = vmatprep.subr.mxu0 0.0
    %1347 = vmatpush1.msra.mxu0 0.0
    %1348 = vmatprep.subr.mxu0 0.0
    %1349 = vmatpush1.msra.mxu0 0.0
    %1350 = vmatprep.subr.mxu0 0.0
    %1351 = vmatpush1.msra.mxu0 0.0
    %1352 = vmatprep.subr.mxu0 0.0
    %1353 = vmatpush1.msra.mxu0 0.0
    %1354 = vmatprep.subr.mxu0 0.0
    %1355 = vmatpush1.msra.mxu0 0.0
    %1356 = vmatprep.subr.mxu0 0.0
    %1357 = vmatpush1.msra.mxu0 0.0
    %1358 = vmatprep.subr.mxu0 0.0
    %1359 = vmatpush1.msra.mxu0 0.0
    %1360 = vmatprep.subr.mxu0 0.0
    %1361 = vmatpush1.msra.mxu0 0.0
    %1362 = vmatprep.subr.mxu0 0.0
    %1363 = vmatpush1.msra.mxu0 0.0
    %1364 = vmatprep.subr.mxu0 0.0
    %1365 = vmatpush1.msra.mxu0 0.0
    %1366 = vmatprep.subr.mxu0 0.0
    %1367 = vmatpush1.msra.mxu0 0.0
    %1368 = vmatprep.subr.mxu0 0.0
    %1369 = vmatpush1.msra.mxu0 0.0
    %1370 = vmatprep.subr.mxu0 0.0
    %1371 = vmatpush1.msra.mxu0 %v84
    %1372 = vmatprep.subr.mxu0 0.0
    %1373 = vmatpush1.msra.mxu0 %v83
    %1374 = vmatprep.subr.mxu0 0.0
    %1375 = vmatpush1.msra.mxu0 %v82
    %1376 = vmatprep.subr.mxu0 0.0
    %1377 = vmatpush1.msra.mxu0 %v81
    %1378 = vmatprep.subr.mxu0 0.0
    %1379 = vmatpush2.msra.mxu0 0.0
    %1380 = vmatprep.subr.mxu0 0.0
    %1381 = vmatpush2.msra.mxu0 0.0
    %1382 = vmatprep.subr.mxu0 0.0
    %1383 = vmatpush2.msra.mxu0 0.0
    %1384 = vmatprep.subr.mxu0 0.0
    %1385 = vmatpush2.msra.mxu0 0.0
    %1386 = vmatprep.subr.mxu0 0.0
    %1387 = vmatpush2.msra.mxu0 0.0
    %1388 = vmatprep.subr.mxu0 0.0
    %1389 = vmatpush2.msra.mxu0 0.0
    %1390 = vmatprep.subr.mxu0 0.0
    %1391 = vmatpush2.msra.mxu0 0.0
    %1392 = vmatprep.subr.mxu0 0.0
    %1393 = vmatpush2.msra.mxu0 0.0
    %1394 = vmatprep.subr.mxu0 0.0
    %1395 = vmatpush2.msra.mxu0 0.0
    %1396 = vmatprep.subr.mxu0 0.0
    %1397 = vmatpush2.msra.mxu0 0.0
    %1398 = vmatprep.subr.mxu0 0.0
    %1399 = vmatpush2.msra.mxu0 0.0
    %1400 = vmatprep.subr.mxu0 0.0
    %1401 = vmatpush2.msra.mxu0 0.0
    %1402 = vmatprep.subr.mxu0 0.0
    %1403 = vmatpush2.msra.mxu0 0.0
    %1404 = vmatprep.subr.mxu0 0.0
    %1405 = vmatpush2.msra.mxu0 0.0
    %1406 = vmatprep.subr.mxu0 0.0
    %1407 = vmatpush2.msra.mxu0 0.0
    %1408 = vmatprep.subr.mxu0 0.0
    %1409 = vmatpush2.msra.mxu0 0.0
    %1410 = vmatprep.mubr.f32.mxu0 0.0
    %1411 = vmatmul.mubr.f32.gmra.mxu0 %v1344
    %v1412 = vpop.f32.mrf.mxu0
    %v1413 = vadd.f32 %v1341, %v1412
    %v1414 = vpop.f32.mrf.mxu0
    %1415 = vdwg.mxu0
    %v1416 = vadd.f32 %v1413, %v243
    %v1417 = vxor.u32 %v1416, 2147483648
    %v1418 = vmul.f32 %v1417, 1.442695
    %v1419 = vpow.pop %v1418
    %v1420 = vadd.f32 %v1419, 1.0
    %v1421 = vrcp.pop %v1420
    %v1422 = vmul.f32 1.0, %v1421
    %v1423 = vtanh.pop %v1416
    %v1424 = vmul.f32 %v1239, %v1422
    %1426 = vrot.lane.b32.xlu0 %v1422, 64
    %v1427 = vpop.permute.xlu0 %1426
    %v1429 = vmul.f32 %v1423, %v1427
    %1431 = vrot.lane.b32.xlu0 %v1429, 32
    %v1432 = vpop.permute.xlu0 %1431
    %v1434 = vadd.f32 %v1424, %v1432
    %v1435 = vtanh.pop %v1434
    %v1436 = vmul.f32 %v1435, %v1427
    %v1439 = vunpack.c.l.s4 1966171168
    %v1440 = vunpack.c.0.s8 %v1439
    %v1441 = vlaneseq
    %v1442 = vshrl.u32 %v1441, 7
    %v1443 = vsub.s32 %v1440, %v1442
    %v1444 = vrot.slane %v1436, %v1443
    %v1445 = vcombine.high %v1444, %v1444
    %v1447 = vunpack.c.l.s4 1966171168
    %v1448 = vunpack.c.0.s8 %v1447
    %v1449 = vlaneseq
    %v1450 = vshrl.u32 %v1449, 7
    %v1451 = vsub.s32 %v1448, %v1450
    %v1452 = vrot.slane %v1444, %v1451
    %v1454 = vunpack.c.l.s4 1966171168
    %v1455 = vunpack.c.0.s8 %v1454
    %v1456 = vlaneseq
    %v1457 = vshrl.u32 %v1456, 7
    %v1458 = vsub.s32 %v1455, %v1457
    %v1459 = vrot.slane %v1445, %v1458
    %1462 = vst.msk [vmem:[#allocation10 + $0x6] sm:$0x1] %vm291, %v1452
    %1463 = vst.msk [vmem:[#allocation10 + $0xe] sm:$0x1] %vm291, %v1459
    %s1464 = scalar_lea.vmem [#allocation2], 14
    %v1465 = vld [vmem:[%s1464] sm:$0x3]
    %v1467 = vsel %vm91, %v1465, 0
    %1469 = vmatprep.subr.mxu0 0.0
    %1470 = vmatpush1.msra.mxu0 0.0
    %1471 = vmatprep.subr.mxu0 0.0
    %1472 = vmatpush1.msra.mxu0 0.0
    %1473 = vmatprep.subr.mxu0 0.0
    %1474 = vmatpush1.msra.mxu0 0.0
    %1475 = vmatprep.subr.mxu0 0.0
    %1476 = vmatpush1.msra.mxu0 0.0
    %1477 = vmatprep.subr.mxu0 0.0
    %1478 = vmatpush1.msra.mxu0 0.0
    %1479 = vmatprep.subr.mxu0 0.0
    %1480 = vmatpush1.msra.mxu0 0.0
    %1481 = vmatprep.subr.mxu0 0.0
    %1482 = vmatpush1.msra.mxu0 0.0
    %1483 = vmatprep.subr.mxu0 0.0
    %1484 = vmatpush1.msra.mxu0 0.0
    %1485 = vmatprep.subr.mxu0 0.0
    %1486 = vmatpush1.msra.mxu0 0.0
    %1487 = vmatprep.subr.mxu0 0.0
    %1488 = vmatpush1.msra.mxu0 0.0
    %1489 = vmatprep.subr.mxu0 0.0
    %1490 = vmatpush1.msra.mxu0 0.0
    %1491 = vmatprep.subr.mxu0 0.0
    %1492 = vmatpush1.msra.mxu0 0.0
    %1493 = vmatprep.subr.mxu0 0.0
    %1494 = vmatpush1.msra.mxu0 0.0
    %1495 = vmatprep.subr.mxu0 0.0
    %1496 = vmatpush1.msra.mxu0 0.0
    %1497 = vmatprep.subr.mxu0 0.0
    %1498 = vmatpush1.msra.mxu0 %v86
    %1499 = vmatprep.subr.mxu0 0.0
    %1500 = vmatpush1.msra.mxu0 %v85
    %1501 = vmatprep.subr.mxu0 0.0
    %1502 = vmatpush2.msra.mxu0 0.0
    %1503 = vmatprep.subr.mxu0 0.0
    %1504 = vmatpush2.msra.mxu0 0.0
    %1505 = vmatprep.subr.mxu0 0.0
    %1506 = vmatpush2.msra.mxu0 0.0
    %1507 = vmatprep.subr.mxu0 0.0
    %1508 = vmatpush2.msra.mxu0 0.0
    %1509 = vmatprep.subr.mxu0 0.0
    %1510 = vmatpush2.msra.mxu0 0.0
    %1511 = vmatprep.subr.mxu0 0.0
    %1512 = vmatpush2.msra.mxu0 0.0
    %1513 = vmatprep.subr.mxu0 0.0
    %1514 = vmatpush2.msra.mxu0 0.0
    %1515 = vmatprep.subr.mxu0 0.0
    %1516 = vmatpush2.msra.mxu0 0.0
    %1517 = vmatprep.subr.mxu0 0.0
    %1518 = vmatpush2.msra.mxu0 0.0
    %1519 = vmatprep.subr.mxu0 0.0
    %1520 = vmatpush2.msra.mxu0 0.0
    %1521 = vmatprep.subr.mxu0 0.0
    %1522 = vmatpush2.msra.mxu0 0.0
    %1523 = vmatprep.subr.mxu0 0.0
    %1524 = vmatpush2.msra.mxu0 0.0
    %1525 = vmatprep.subr.mxu0 0.0
    %1526 = vmatpush2.msra.mxu0 0.0
    %1527 = vmatprep.subr.mxu0 0.0
    %1528 = vmatpush2.msra.mxu0 0.0
    %1529 = vmatprep.subr.mxu0 0.0
    %1530 = vmatpush2.msra.mxu0 0.0
    %1531 = vmatprep.subr.mxu0 0.0
    %1532 = vmatpush2.msra.mxu0 0.0
    %1533 = vmatprep.mubr.f32.mxu0 0.0
    %1534 = vmatmul.mubr.f32.gmra.mxu0 %v1467
    %v1535 = vpop.f32.mrf.mxu0
    %v1536 = vadd.f32 0.0, %v1535
    %v1537 = vpop.f32.mrf.mxu0
    %1538 = vdwg.mxu0
    %v1539 = vsel %vm165, %v1436, 0
    %1541 = vmatprep.subr.mxu0 0.0
    %1542 = vmatpush1.msra.mxu0 0.0
    %1543 = vmatprep.subr.mxu0 0.0
    %1544 = vmatpush1.msra.mxu0 0.0
    %1545 = vmatprep.subr.mxu0 0.0
    %1546 = vmatpush1.msra.mxu0 0.0
    %1547 = vmatprep.subr.mxu0 0.0
    %1548 = vmatpush1.msra.mxu0 0.0
    %1549 = vmatprep.subr.mxu0 0.0
    %1550 = vmatpush1.msra.mxu0 0.0
    %1551 = vmatprep.subr.mxu0 0.0
    %1552 = vmatpush1.msra.mxu0 0.0
    %1553 = vmatprep.subr.mxu0 0.0
    %1554 = vmatpush1.msra.mxu0 0.0
    %1555 = vmatprep.subr.mxu0 0.0
    %1556 = vmatpush1.msra.mxu0 0.0
    %1557 = vmatprep.subr.mxu0 0.0
    %1558 = vmatpush1.msra.mxu0 0.0
    %1559 = vmatprep.subr.mxu0 0.0
    %1560 = vmatpush1.msra.mxu0 0.0
    %1561 = vmatprep.subr.mxu0 0.0
    %1562 = vmatpush1.msra.mxu0 0.0
    %1563 = vmatprep.subr.mxu0 0.0
    %1564 = vmatpush1.msra.mxu0 0.0
    %1565 = vmatprep.subr.mxu0 0.0
    %1566 = vmatpush1.msra.mxu0 %v84
    %1567 = vmatprep.subr.mxu0 0.0
    %1568 = vmatpush1.msra.mxu0 %v83
    %1569 = vmatprep.subr.mxu0 0.0
    %1570 = vmatpush1.msra.mxu0 %v82
    %1571 = vmatprep.subr.mxu0 0.0
    %1572 = vmatpush1.msra.mxu0 %v81
    %1573 = vmatprep.subr.mxu0 0.0
    %1574 = vmatpush2.msra.mxu0 0.0
    %1575 = vmatprep.subr.mxu0 0.0
    %1576 = vmatpush2.msra.mxu0 0.0
    %1577 = vmatprep.subr.mxu0 0.0
    %1578 = vmatpush2.msra.mxu0 0.0
    %1579 = vmatprep.subr.mxu0 0.0
    %1580 = vmatpush2.msra.mxu0 0.0
    %1581 = vmatprep.subr.mxu0 0.0
    %1582 = vmatpush2.msra.mxu0 0.0
    %1583 = vmatprep.subr.mxu0 0.0
    %1584 = vmatpush2.msra.mxu0 0.0
    %1585 = vmatprep.subr.mxu0 0.0
    %1586 = vmatpush2.msra.mxu0 0.0
    %1587 = vmatprep.subr.mxu0 0.0
    %1588 = vmatpush2.msra.mxu0 0.0
    %1589 = vmatprep.subr.mxu0 0.0
    %1590 = vmatpush2.msra.mxu0 0.0
    %1591 = vmatprep.subr.mxu0 0.0
    %1592 = vmatpush2.msra.mxu0 0.0
    %1593 = vmatprep.subr.mxu0 0.0
    %1594 = vmatpush2.msra.mxu0 0.0
    %1595 = vmatprep.subr.mxu0 0.0
    %1596 = vmatpush2.msra.mxu0 0.0
    %1597 = vmatprep.subr.mxu0 0.0
    %1598 = vmatpush2.msra.mxu0 0.0
    %1599 = vmatprep.subr.mxu0 0.0
    %1600 = vmatpush2.msra.mxu0 0.0
    %1601 = vmatprep.subr.mxu0 0.0
    %1602 = vmatpush2.msra.mxu0 0.0
    %1603 = vmatprep.subr.mxu0 0.0
    %1604 = vmatpush2.msra.mxu0 0.0
    %1605 = vmatprep.mubr.f32.mxu0 0.0
    %1606 = vmatmul.mubr.f32.gmra.mxu0 %v1539
    %v1607 = vpop.f32.mrf.mxu0
    %v1608 = vadd.f32 %v1536, %v1607
    %v1609 = vpop.f32.mrf.mxu0
    %1610 = vdwg.mxu0
    %v1611 = vadd.f32 %v1608, %v243
    %v1612 = vxor.u32 %v1611, 2147483648
    %v1613 = vmul.f32 %v1612, 1.442695
    %v1614 = vpow.pop %v1613
    %v1615 = vadd.f32 %v1614, 1.0
    %v1616 = vrcp.pop %v1615
    %v1617 = vmul.f32 1.0, %v1616
    %v1618 = vtanh.pop %v1611
    %v1619 = vmul.f32 %v1434, %v1617
    %1621 = vrot.lane.b32.xlu0 %v1617, 64
    %v1622 = vpop.permute.xlu0 %1621
    %v1624 = vmul.f32 %v1618, %v1622
    %1626 = vrot.lane.b32.xlu0 %v1624, 32
    %v1627 = vpop.permute.xlu0 %1626
    %v1629 = vadd.f32 %v1619, %v1627
    %v1630 = vtanh.pop %v1629
    %v1631 = vmul.f32 %v1630, %v1622
    %v1634 = vunpack.c.l.s4 1966171168
    %v1635 = vunpack.c.0.s8 %v1634
    %v1636 = vlaneseq
    %v1637 = vshrl.u32 %v1636, 7
    %v1638 = vsub.s32 %v1635, %v1637
    %v1639 = vrot.slane %v1631, %v1638
    %v1640 = vcombine.high %v1639, %v1639
    %v1642 = vunpack.c.l.s4 1966171168
    %v1643 = vunpack.c.0.s8 %v1642
    %v1644 = vlaneseq
    %v1645 = vshrl.u32 %v1644, 7
    %v1646 = vsub.s32 %v1643, %v1645
    %v1647 = vrot.slane %v1639, %v1646
    %v1649 = vunpack.c.l.s4 1966171168
    %v1650 = vunpack.c.0.s8 %v1649
    %v1651 = vlaneseq
    %v1652 = vshrl.u32 %v1651, 7
    %v1653 = vsub.s32 %v1650, %v1652
    %v1654 = vrot.slane %v1640, %v1653
    %1657 = vst.msk [vmem:[#allocation10 + $0x7] sm:$0x1] %vm291, %v1647
    %1658 = vst.msk [vmem:[#allocation10 + $0xf] sm:$0x1] %vm291, %v1654
    %vm1659 = vcmask 254976
    %1660 = vst.msk [vmem:[#allocation11] sm:$0x3] %vm1659, %v1631
    %1661 = vst.msk [vmem:[#allocation13] sm:$0x3] %vm1659, %v1629
    // Predicated region
    $region42: #{tpu_custom_call.1} parent=1 // pred_check
      _
    $region43: #{tpu_custom_call.1} parent=1 // pred_check_branch
      %1663 = sbr.rel (0) target = $region45
    $region44: #{tpu_custom_call.1} parent=1 // pred_region
      %s1665 = ssub.s32 256, 256
      %1666 = vsyncadd [#allocation4], %s1665
      %s1667 = sshll.u32 [#allocation10], 4
      %s1668 = int_to_ptr.vmem [resolvable:$true] %s1667
      %1673 = dma.vmem_to_hbm [thread:$0]  %s1668, 256, %s6, [#allocation4], 128, 128, 8
    $region45: #{tpu_custom_call.1} parent=1 // pred_fallthru
      _
    // Predicated region
    $region46: #{tpu_custom_call.1} parent=1 // pred_check
      _
    $region47: #{tpu_custom_call.1} parent=1 // pred_check_branch
      %1675 = sbr.rel (0) target = $region49
    $region48: #{tpu_custom_call.1} parent=1 // pred_region
      %s1677 = ssub.s32 32, 32
      %1678 = vsyncadd [#allocation12], %s1677
      %s1680 = sshll.u32 [#allocation11], 4
      %s1681 = int_to_ptr.vmem [resolvable:$true] %s1680
      %1683 = dma.vmem_to_hbm [thread:$0]  %s1681, 32, %s7, [#allocation12]
    $region49: #{tpu_custom_call.1} parent=1 // pred_fallthru
      _
    // Predicated region
    $region50: #{tpu_custom_call.1} parent=1 // pred_check
      _
    $region51: #{tpu_custom_call.1} parent=1 // pred_check_branch
      %1685 = sbr.rel (0) target = $region53
    $region52: #{tpu_custom_call.1} parent=1 // pred_region
      %s1687 = ssub.s32 32, 32
      %1688 = vsyncadd [#allocation12], %s1687
      %s1690 = sshll.u32 [#allocation13], 4
      %s1691 = int_to_ptr.vmem [resolvable:$true] %s1690
      %1693 = dma.vmem_to_hbm [thread:$0]  %s1691, 32, %s8, [#allocation12]
    $region53: #{tpu_custom_call.1} parent=1 // pred_fallthru
      _
    // Predicated region
    $region54: #{tpu_custom_call.1} parent=1 // pred_check
      _
    $region55: #{tpu_custom_call.1} parent=1 // pred_check_branch
      %1695 = sbr.rel (0) target = $region57
    $region56: #{tpu_custom_call.1} parent=1 // pred_region
      %1696 = dma.done [#allocation4], 256
    $region57: #{tpu_custom_call.1} parent=1 // pred_fallthru
      _
    // Predicated region
    $region58: #{tpu_custom_call.1} parent=1 // pred_check
      _
    $region59: #{tpu_custom_call.1} parent=1 // pred_check_branch
      %1698 = sbr.rel (0) target = $region61
    $region60: #{tpu_custom_call.1} parent=1 // pred_region
      %1699 = dma.done [#allocation12], 32
    $region61: #{tpu_custom_call.1} parent=1 // pred_fallthru
      _
    // Predicated region
    $region62: #{tpu_custom_call.1} parent=1 // pred_check
      _
    $region63: #{tpu_custom_call.1} parent=1 // pred_check_branch
      %1701 = sbr.rel (0) target = $region65
    $region64: #{tpu_custom_call.1} parent=1 // pred_region
      %1702 = dma.done [#allocation12], 32
    $region65: #{tpu_custom_call.1} parent=1 // pred_fallthru
      _
    %1703 = vsyncpa [#allocation3], 1
    %1704 = vsyncpa [#allocation6], 1
    %1705 = vsyncpa [#allocation9], 1
    %1706 = vsyncpa [#allocation4], 1
    %1707 = vsyncpa [#allocation12], 1

</llo_original>
